<compile_context>
chip_gen: v7x
topology: tpu7x:2x2x1
jax: 0.10.0
libtpu: 0.0.40
codegen_flags: <defaults>
</compile_context>

<pallas_src>
import jax
import jax.numpy as jnp
from jax.experimental import pallas as pl
from jax.experimental.pallas import tpu as pltpu


def mlp_kernel(x_ref, w1_ref, b1_ref, w2_ref, b2_ref, o_ref):
    # x_ref : (TB, ninputs)      bf16
    # w1_ref: (ninputs, nhidden) bf16     b1_ref: (1, nhidden)  f32
    # w2_ref: (nhidden, npad)    bf16     b2_ref: (1, npad)     f32
    # o_ref : (TB, npad)         f32   (npad = nclasses padded to a multiple of 128)
    h = jnp.dot(x_ref[...], w1_ref[...], preferred_element_type=jnp.float32)
    h = jnp.tanh(h + b1_ref[...])                 # bias + tanh in f32 (EUP path, v5e-safe)
    h = h.astype(jnp.bfloat16)                    # bf16 operand for the 2nd MXU pass
    out = jnp.dot(h, w2_ref[...], preferred_element_type=jnp.float32) + b2_ref[...]
    o_ref[...] = out.astype(o_ref.dtype)          # lane-dense (TB, 128·k) store


def _mlp_forward(x_img, w1, b1, w2, b2, batch_tile):
    """x_img: (B, C, H, W) float32.
    w1: (nhidden, ninputs), b1: (nhidden,), w2: (nclasses, nhidden), b2: (nclasses,)
    (PyTorch nn.Linear conventions).  batch_tile must be a multiple of 8."""
    B = x_img.shape[0]
    ninputs = 1
    for d in x_img.shape[1:]:
        ninputs *= int(d)
    nhidden = w1.shape[0]
    nclasses = w2.shape[0]

    # ---- glue: flatten, cast MXU operands to bf16, pad output dim to lane width ----
    x = x_img.reshape(B, ninputs).astype(jnp.bfloat16)
    w1_t = w1.T.astype(jnp.bfloat16)                       # (ninputs, nhidden)
    b1_2d = b1.reshape(1, nhidden).astype(jnp.float32)

    npad = ((nclasses + 127) // 128) * 128                 # lane-dense output width (>=128)
    w2_t = jnp.zeros((nhidden, npad), jnp.bfloat16).at[:, :nclasses].set(
        w2.T.astype(jnp.bfloat16))
    b2_2d = jnp.zeros((1, npad), jnp.float32).at[:, :nclasses].set(
        b2.astype(jnp.float32))

    # ---- batch tiling: pad ragged batches, grid > 1 so the x DMA pipelines vs compute ----
    # VMEM budget per grid step (bf16 x): 2 * tb * ninputs * 2 B for the double-buffered x tile
    # plus ~O(1 MiB) resident weights + (tb, npad) f32 output.  For real batch sizes pick
    # tb ~ 256-512 on v5e/v6e; cap lower on v7x (64 MiB physical / 32 MiB default scoped VMEM)
    # or raise vmem_limit_bytes.
    tb = batch_tile
    B_pad = ((B + tb - 1) // tb) * tb
    if B_pad != B:
        x = jnp.pad(x, ((0, B_pad - B), (0, 0)))
    grid = (B_pad // tb,)

    cost = pl.CostEstimate(
        flops=2 * B_pad * ninputs * nhidden + 2 * B_pad * nhidden * npad,
        transcendentals=B_pad * nhidden,
        bytes_accessed=(B_pad * ninputs * 2 + ninputs * nhidden * 2 + nhidden * 4
                        + nhidden * npad * 2 + npad * 4 + B_pad * npad * 4),
    )

    out = pl.pallas_call(
        mlp_kernel,
        out_shape=jax.ShapeDtypeStruct((B_pad, npad), jnp.float32),
        grid_spec=pltpu.PrefetchScalarGridSpec(
            num_scalar_prefetch=0,
            grid=grid,
            in_specs=[
                pl.BlockSpec((tb, ninputs), lambda i: (i, 0)),        # x tile
                pl.BlockSpec((ninputs, nhidden), lambda i: (0, 0)),   # W1 (resident)
                pl.BlockSpec((1, nhidden), lambda i: (0, 0)),         # b1
                pl.BlockSpec((nhidden, npad), lambda i: (0, 0)),      # W2 padded (resident)
                pl.BlockSpec((1, npad), lambda i: (0, 0)),            # b2 padded
            ],
            out_specs=pl.BlockSpec((tb, npad), lambda i: (i, 0)),     # lane-dense output
        ),
        compiler_params=pltpu.CompilerParams(
            dimension_semantics=("parallel",),
        ),
        cost_estimate=cost,
    )(x, w1_t, b1_2d, w2_t, b2_2d)

    return out[:B, :nclasses]


# jit so weight transposes / casts / padding constant-fold out of the per-call path.
mlp_forward = jax.jit(_mlp_forward, static_argnames=("batch_tile",))


def _torch_style_linear_init(key, out_features, in_features):
    # nn.Linear default init: U(-1/sqrt(fan_in), 1/sqrt(fan_in)) for weight and bias.
    kw, kb = jax.random.split(key)
    bound = 1.0 / jnp.sqrt(jnp.float32(in_features))
    w = jax.random.uniform(kw, (out_features, in_features), jnp.float32, -bound, bound)
    b = jax.random.uniform(kb, (out_features,), jnp.float32, -bound, bound)
    return w, b


if __name__ == "__main__":
    # Small shapes consistent with the module: a (3, 16, 16) image flattened -> ninputs = 768,
    # nhidden = 512 (as in the spec), nclasses = 2, batch = 16 with tile 8 -> grid of 2.
    B, C, H, W = 16, 3, 16, 16
    ninputs = C * H * W
    nhidden = 512
    nclasses = 2

    key = jax.random.PRNGKey(0)
    k_x, k_fc1, k_fc2 = jax.random.split(key, 3)

    x = jax.random.normal(k_x, (B, C, H, W), jnp.float32)
    w1, b1 = _torch_style_linear_init(k_fc1, nhidden, ninputs)    # fc1
    w2, b2 = _torch_style_linear_init(k_fc2, nclasses, nhidden)   # fc2

    out = mlp_forward(x, w1, b1, w2, b2, batch_tile=8)
    out = jax.block_until_ready(out)
    assert out.shape == (B, nclasses)

    x_flat = x.reshape(B, ninputs)

    # Reference matching the kernel's precision (bf16 MXU operands, f32 accumulation).
    xb = x_flat.astype(jnp.bfloat16)
    w1b = w1.T.astype(jnp.bfloat16)
    w2b = w2.T.astype(jnp.bfloat16)
    h_ref = jnp.tanh(jnp.dot(xb, w1b, preferred_element_type=jnp.float32) + b1)
    ref_bf = jnp.dot(h_ref.astype(jnp.bfloat16), w2b,
                     preferred_element_type=jnp.float32) + b2
    assert jnp.allclose(out, ref_bf, atol=1e-3, rtol=1e-3), "mismatch vs bf16-operand reference"

    # Full-f32 reference: looser tolerance covers the bf16 operand quantization.
    ref_f32 = jnp.tanh(x_flat @ w1.T + b1) @ w2.T + b2
    assert jnp.allclose(out, ref_f32, atol=5e-2, rtol=5e-2), "mismatch vs f32 reference"

    print("KERNEL_OK")
</pallas_src>

<mosaic_0001>
module attributes {stable_mosaic.version = 11 : i64} {
  func.func @mlp_kernel(%arg0: i32, %arg1: memref<8x768xbf16, #tpu.memory_space<vmem>>, %arg2: memref<768x512xbf16, #tpu.memory_space<vmem>>, %arg3: memref<1x512xf32, #tpu.memory_space<vmem>>, %arg4: memref<512x128xbf16, #tpu.memory_space<vmem>>, %arg5: memref<1x128xf32, #tpu.memory_space<vmem>>, %arg6: memref<8x128xf32, #tpu.memory_space<vmem>>) attributes {dimension_semantics = [#tpu.dimension_semantics<parallel>], iteration_bounds = array<i64: 2>, scalar_prefetch = 0 : i64, scratch_operands = 0 : i64, tpu.core_type = #tpu.core_type<tc>, window_params = [{transform_indices = @transform_0, window_bounds = array<i64: 8, 768>}, {pipeline_mode = #tpu.pipeline_mode<synchronous>, transform_indices = @transform_1, window_bounds = array<i64: 768, 512>}, {pipeline_mode = #tpu.pipeline_mode<synchronous>, transform_indices = @transform_2, window_bounds = array<i64: 1, 512>}, {pipeline_mode = #tpu.pipeline_mode<synchronous>, transform_indices = @transform_3, window_bounds = array<i64: 512, 128>}, {pipeline_mode = #tpu.pipeline_mode<synchronous>, transform_indices = @transform_4, window_bounds = array<i64: 1, 128>}, {transform_indices = @transform_5, window_bounds = array<i64: 8, 128>}]} {
    %c0 = arith.constant 0 : index
    %c0_0 = arith.constant 0 : index
    %0 = vector.load %arg1[%c0, %c0_0] : memref<8x768xbf16, #tpu.memory_space<vmem>>, vector<8x768xbf16>
    %c0_1 = arith.constant 0 : index
    %c0_2 = arith.constant 0 : index
    %1 = vector.load %arg2[%c0_1, %c0_2] : memref<768x512xbf16, #tpu.memory_space<vmem>>, vector<768x512xbf16>
    %cst = arith.constant dense<0.000000e+00> : vector<8x512xf32>
    %2 = tpu.matmul %0, %1, %cst {dimension_numbers = #tpu.dot_dimension_numbers<[1], [0], [0], [1], [0, 0, 1, 1], [], []>} : vector<8x768xbf16>, vector<768x512xbf16>, vector<8x512xf32> -> vector<8x512xf32>
    %c0_3 = arith.constant 0 : index
    %c0_4 = arith.constant 0 : index
    %3 = vector.load %arg3[%c0_3, %c0_4] : memref<1x512xf32, #tpu.memory_space<vmem>>, vector<1x512xf32>
    %4 = vector.broadcast %3 : vector<1x512xf32> to vector<8x512xf32>
    %5 = arith.addf %2, %4 : vector<8x512xf32>
    %6 = math.tanh %5 : vector<8x512xf32>
    %7 = arith.truncf %6 : vector<8x512xf32> to vector<8x512xbf16>
    %c0_5 = arith.constant 0 : index
    %c0_6 = arith.constant 0 : index
    %8 = vector.load %arg4[%c0_5, %c0_6] : memref<512x128xbf16, #tpu.memory_space<vmem>>, vector<512x128xbf16>
    %cst_7 = arith.constant dense<0.000000e+00> : vector<8x128xf32>
    %9 = tpu.matmul %7, %8, %cst_7 {dimension_numbers = #tpu.dot_dimension_numbers<[1], [0], [0], [1], [0, 0, 1, 1], [], []>} : vector<8x512xbf16>, vector<512x128xbf16>, vector<8x128xf32> -> vector<8x128xf32>
    %c0_8 = arith.constant 0 : index
    %c0_9 = arith.constant 0 : index
    %10 = vector.load %arg5[%c0_8, %c0_9] : memref<1x128xf32, #tpu.memory_space<vmem>>, vector<1x128xf32>
    %11 = vector.broadcast %10 : vector<1x128xf32> to vector<8x128xf32>
    %12 = arith.addf %9, %11 : vector<8x128xf32>
    %c0_10 = arith.constant 0 : index
    %c0_11 = arith.constant 0 : index
    %13 = vector.load %arg6[%c0_10, %c0_11] : memref<8x128xf32, #tpu.memory_space<vmem>>, vector<8x128xf32>
    tpu.vector_store %arg6[%c0_10, %c0_11], %12 {strides = array<i32>} : memref<8x128xf32, #tpu.memory_space<vmem>>, vector<8x128xf32>,
    return
  }
  func.func @transform_0(%arg0: i32) -> (i32, i32) {
    %c0_i32 = arith.constant 0 : i32
    %c0_i32_0 = arith.constant 0 : i32
    return %arg0, %c0_i32 : i32, i32
  }
  func.func @transform_1(%arg0: i32) -> (i32, i32) {
    %c0_i32 = arith.constant 0 : i32
    %c0_i32_0 = arith.constant 0 : i32
    %c0_i32_1 = arith.constant 0 : i32
    return %c0_i32, %c0_i32_0 : i32, i32
  }
  func.func @transform_2(%arg0: i32) -> (i32, i32) {
    %c0_i32 = arith.constant 0 : i32
    %c0_i32_0 = arith.constant 0 : i32
    %c0_i32_1 = arith.constant 0 : i32
    return %c0_i32, %c0_i32_0 : i32, i32
  }
  func.func @transform_3(%arg0: i32) -> (i32, i32) {
    %c0_i32 = arith.constant 0 : i32
    %c0_i32_0 = arith.constant 0 : i32
    %c0_i32_1 = arith.constant 0 : i32
    return %c0_i32, %c0_i32_0 : i32, i32
  }
  func.func @transform_4(%arg0: i32) -> (i32, i32) {
    %c0_i32 = arith.constant 0 : i32
    %c0_i32_0 = arith.constant 0 : i32
    %c0_i32_1 = arith.constant 0 : i32
    return %c0_i32, %c0_i32_0 : i32, i32
  }
  func.func @transform_5(%arg0: i32) -> (i32, i32) {
    %c0_i32 = arith.constant 0 : i32
    %c0_i32_0 = arith.constant 0 : i32
    return %arg0, %c0_i32 : i32, i32
  }
}

</mosaic_0001>

<llo_original>
// kernel: _mlp_forward.1
$region0: #{_mlp_forward.1}
  #allocation0 [shape = 'u32[]', space=smem, size = 0x4, offset = 0x4, fixed_abs, tag = 'smem constant byte address 0x4 - core index']
  #allocation1 [shape = 'u32[144,128]{1,0:T(1,128)}', space=vmem, size = 0x12000, scoped, tag = 'internal scratch']
  %s0 = inlined_call_operand.vmem [shape: bf16[16,768], index: 0, kind: input, shape index: {}]
  %s1 = inlined_call_operand.vmem [shape: bf16[768,512], index: 1, kind: input, shape index: {}]
  %s2 = inlined_call_operand.vmem [shape: f32[1,512], index: 2, kind: input, shape index: {}]
  %s3 = inlined_call_operand.vmem [shape: bf16[512,128], index: 3, kind: input, shape index: {}]
  %s4 = inlined_call_operand.vmem [shape: f32[1,128], index: 4, kind: input, shape index: {}]
  %s5 = inlined_call_operand.vmem [shape: f32[16,128], index: 5, kind: output, shape index: {}]
  %s6 = sld [smem:[#allocation0]]
  $region53: #{_mlp_forward.1} parent=0
    _
  %s8 = ssub.s32 1, %s6
  %s9 = scalar_select 0, %s8, %s6
  loop: start=0, step=1, limit=4
  $region2: #{_mlp_forward.1} parent=0 // loop_pre_header
    _
  $region3: #{_mlp_forward.1} parent=0 // loop_header
    %s11 = sphi 0, %s15
    %p12 = scmp.ge.s32.totalorder %s11, 4
    %s21 = sphi 0, %s23
    %s24 = sphi 0, %s21
    %s25 = sphi 0, %s24
    %s41 = sphi 0, %s25
    %s45 = sphi 0, %s45
    %s47 = sphi 0, %s45
    %s48 = sphi 0, %s47
    %s62 = sphi 0, %s48
    %s66 = sphi 0, %s66
    %s68 = sphi 0, %s66
    %s69 = sphi 0, %s68
    %s83 = sphi 0, %s69
    %s87 = sphi 0, %s87
    %s89 = sphi 0, %s87
    %s90 = sphi 0, %s89
    %s104 = sphi 0, %s90
    %s108 = sphi 0, %s108
    %s110 = sphi 0, %s108
    %s111 = sphi 0, %s110
    %s125 = sphi 0, %s111
    %s131 = sphi 0, %s133
    %s134 = sphi 0, %s131
    %s135 = sphi 0, %s134
    %s151 = sphi 0, %s135
  $region4: #{_mlp_forward.1} parent=0 // loop_header_branch
    %14 = sbr.rel (%p12) target = $region8
  $region5: #{_mlp_forward.1} parent=0 // loop_body
    %s16 = ssub.s32 %s11, 1
    %s17 = ssub.s32 %s11, 2
    %s18 = sadd.s32 %s11, 1
    %s19 = ssub.s32 %s11, %s18
    %p20 = scmp.eq.s32.totalorder %s19, 0
    %s22 = sadd.s32 %s21, 1
    %s23 = scalar_select %p20, %s21, %s22
    %p26 = pneg %p20
    %p27 = scmp.eq.s32.totalorder %s11, 1
    %p28 = por %p26, %p27
    %p29 = scmp.ne.s32.totalorder %s21, %s24
    %p30 = scmp.eq.s32.totalorder %s11, 0
    %p31 = por %p29, %p30
    %p32 = scmp.ne.s32.totalorder %s21, %s24
    %p33 = scmp.eq.s32.totalorder %s16, 1
    %p34 = por %p32, %p33
    %p35 = scmp.ne.s32.totalorder %s24, %s25
    %p36 = scmp.eq.s32.totalorder %s16, 0
    %p37 = por %p35, %p36
    %p38 = scmp.ne.s32.totalorder %s24, %s25
    %p39 = scmp.eq.s32.totalorder %s17, 1
    %p40 = por %p38, %p39
    %p42 = scmp.ne.s32.totalorder %s25, %s41
    %p43 = scmp.eq.s32.totalorder %s17, 0
    %p44 = por %p42, %p43
    %s46 = sadd.s32 %s45, 1
    %p49 = scmp.eq.s32.totalorder %s11, 1
    %p50 = scmp.ne.s32.totalorder %s45, %s47
    %p51 = scmp.eq.s32.totalorder %s11, 0
    %p52 = por %p50, %p51
    %p53 = scmp.ne.s32.totalorder %s45, %s47
    %p54 = scmp.eq.s32.totalorder %s16, 1
    %p55 = por %p53, %p54
    %p56 = scmp.ne.s32.totalorder %s47, %s48
    %p57 = scmp.eq.s32.totalorder %s16, 0
    %p58 = por %p56, %p57
    %p59 = scmp.ne.s32.totalorder %s47, %s48
    %p60 = scmp.eq.s32.totalorder %s17, 1
    %p61 = por %p59, %p60
    %p63 = scmp.ne.s32.totalorder %s48, %s62
    %p64 = scmp.eq.s32.totalorder %s17, 0
    %p65 = por %p63, %p64
    %s67 = sadd.s32 %s66, 1
    %p70 = scmp.eq.s32.totalorder %s11, 1
    %p71 = scmp.ne.s32.totalorder %s66, %s68
    %p72 = scmp.eq.s32.totalorder %s11, 0
    %p73 = por %p71, %p72
    %p74 = scmp.ne.s32.totalorder %s66, %s68
    %p75 = scmp.eq.s32.totalorder %s16, 1
    %p76 = por %p74, %p75
    %p77 = scmp.ne.s32.totalorder %s68, %s69
    %p78 = scmp.eq.s32.totalorder %s16, 0
    %p79 = por %p77, %p78
    %p80 = scmp.ne.s32.totalorder %s68, %s69
    %p81 = scmp.eq.s32.totalorder %s17, 1
    %p82 = por %p80, %p81
    %p84 = scmp.ne.s32.totalorder %s69, %s83
    %p85 = scmp.eq.s32.totalorder %s17, 0
    %p86 = por %p84, %p85
    %s88 = sadd.s32 %s87, 1
    %p91 = scmp.eq.s32.totalorder %s11, 1
    %p92 = scmp.ne.s32.totalorder %s87, %s89
    %p93 = scmp.eq.s32.totalorder %s11, 0
    %p94 = por %p92, %p93
    %p95 = scmp.ne.s32.totalorder %s87, %s89
    %p96 = scmp.eq.s32.totalorder %s16, 1
    %p97 = por %p95, %p96
    %p98 = scmp.ne.s32.totalorder %s89, %s90
    %p99 = scmp.eq.s32.totalorder %s16, 0
    %p100 = por %p98, %p99
    %p101 = scmp.ne.s32.totalorder %s89, %s90
    %p102 = scmp.eq.s32.totalorder %s17, 1
    %p103 = por %p101, %p102
    %p105 = scmp.ne.s32.totalorder %s90, %s104
    %p106 = scmp.eq.s32.totalorder %s17, 0
    %p107 = por %p105, %p106
    %s109 = sadd.s32 %s108, 1
    %p112 = scmp.eq.s32.totalorder %s11, 1
    %p113 = scmp.ne.s32.totalorder %s108, %s110
    %p114 = scmp.eq.s32.totalorder %s11, 0
    %p115 = por %p113, %p114
    %p116 = scmp.ne.s32.totalorder %s108, %s110
    %p117 = scmp.eq.s32.totalorder %s16, 1
    %p118 = por %p116, %p117
    %p119 = scmp.ne.s32.totalorder %s110, %s111
    %p120 = scmp.eq.s32.totalorder %s16, 0
    %p121 = por %p119, %p120
    %p122 = scmp.ne.s32.totalorder %s110, %s111
    %p123 = scmp.eq.s32.totalorder %s17, 1
    %p124 = por %p122, %p123
    %p126 = scmp.ne.s32.totalorder %s111, %s125
    %p127 = scmp.eq.s32.totalorder %s17, 0
    %p128 = por %p126, %p127
    %s129 = ssub.s32 %s11, %s18
    %p130 = scmp.eq.s32.totalorder %s129, 0
    %s132 = sadd.s32 %s131, 1
    %s133 = scalar_select %p130, %s131, %s132
    %p136 = pneg %p130
    %p137 = scmp.eq.s32.totalorder %s11, 1
    %p138 = por %p136, %p137
    %p139 = scmp.ne.s32.totalorder %s131, %s134
    %p140 = scmp.eq.s32.totalorder %s11, 0
    %p141 = por %p139, %p140
    %p142 = scmp.ne.s32.totalorder %s131, %s134
    %p143 = scmp.eq.s32.totalorder %s16, 1
    %p144 = por %p142, %p143
    %p145 = scmp.ne.s32.totalorder %s134, %s135
    %p146 = scmp.eq.s32.totalorder %s16, 0
    %p147 = por %p145, %p146
    %p148 = scmp.ne.s32.totalorder %s134, %s135
    %p149 = scmp.eq.s32.totalorder %s17, 1
    %p150 = por %p148, %p149
    %p152 = scmp.ne.s32.totalorder %s135, %s151
    %p153 = scmp.eq.s32.totalorder %s17, 0
    %p154 = por %p152, %p153
    %p155 = scmp.le.s32.totalorder 1, %s11
    %p156 = scmp.lt.s32.totalorder %s11, 3
    %p157 = pnand %p155, %p156
    %p158 = pneg %p157
    // Predicated region
    $region9: #{_mlp_forward.1} parent=5 // pred_check
      _
    $region10: #{_mlp_forward.1} parent=5 // pred_check_branch
      %160 = sbr.rel (%p157) target = $region12
    $region11: #{_mlp_forward.1} parent=5 // pred_region
      %s161 = ssub.s32 %s11, 1
      // Predicated region
      $region13: #{_mlp_forward.1} parent=11 // pred_check
        %p162 = pneg %p58
      $region14: #{_mlp_forward.1} parent=11 // pred_check_branch
        %164 = sbr.rel (%p162) target = $region16
      $region15: #{_mlp_forward.1} parent=11 // pred_region
        _
      $region16: #{_mlp_forward.1} parent=11 // pred_fallthru
        _
      // Predicated region
      $region17: #{_mlp_forward.1} parent=11 // pred_check
        %p165 = pneg %p79
      $region18: #{_mlp_forward.1} parent=11 // pred_check_branch
        %167 = sbr.rel (%p165) target = $region20
      $region19: #{_mlp_forward.1} parent=11 // pred_region
        _
      $region20: #{_mlp_forward.1} parent=11 // pred_fallthru
        _
      // Predicated region
      $region21: #{_mlp_forward.1} parent=11 // pred_check
        %p168 = pneg %p100
      $region22: #{_mlp_forward.1} parent=11 // pred_check_branch
        %170 = sbr.rel (%p168) target = $region24
      $region23: #{_mlp_forward.1} parent=11 // pred_region
        _
      $region24: #{_mlp_forward.1} parent=11 // pred_fallthru
        _
      // Predicated region
      $region25: #{_mlp_forward.1} parent=11 // pred_check
        %p171 = pneg %p121
      $region26: #{_mlp_forward.1} parent=11 // pred_check_branch
        %173 = sbr.rel (%p171) target = $region28
      $region27: #{_mlp_forward.1} parent=11 // pred_region
        _
      $region28: #{_mlp_forward.1} parent=11 // pred_fallthru
        _
    $region12: #{_mlp_forward.1} parent=5 // pred_fallthru
      _
    %p174 = scmp.lt.s32.totalorder %s11, 2
    // Predicated region
    $region29: #{_mlp_forward.1} parent=5 // pred_check
      %p175 = pneg %p174
    $region30: #{_mlp_forward.1} parent=5 // pred_check_branch
      %177 = sbr.rel (%p175) target = $region32
    $region31: #{_mlp_forward.1} parent=5 // pred_region
      // Predicated region
      $region33: #{_mlp_forward.1} parent=31 // pred_check
        %p178 = pneg %p31
      $region34: #{_mlp_forward.1} parent=31 // pred_check_branch
        %180 = sbr.rel (%p178) target = $region36
      $region35: #{_mlp_forward.1} parent=31 // pred_region
        %p181 = scmp.lt.s32.totalorder %s11, 1
        %s182 = scalar_select %p181, %s11, 1
        %s183 = smul.addr %s182, 6
        %s184 = smul.addr %s183, 4
        %s185 = scalar_lea.vmem %s0, %s184
      $region36: #{_mlp_forward.1} parent=31 // pred_fallthru
        _
    $region32: #{_mlp_forward.1} parent=5 // pred_fallthru
      _
    %p186 = scmp.le.s32.totalorder 1, %s11
    %p187 = scmp.lt.s32.totalorder %s11, 3
    %p188 = pnand %p186, %p187
    %p189 = pneg %p188
    // Predicated region
    $region37: #{_mlp_forward.1} parent=5 // pred_check
      _
    $region38: #{_mlp_forward.1} parent=5 // pred_check_branch
      %191 = sbr.rel (%p188) target = $region40
    $region39: #{_mlp_forward.1} parent=5 // pred_region
      %s192 = ssub.s32 %s11, 1
      %p193 = scmp.lt.s32.totalorder %s16, 1
      %s194 = scalar_select %p193, %s16, 1
      %s195 = smul.addr %s194, 6
      %s196 = smul.addr %s195, 4
      %s197 = scalar_lea.vmem %s0, %s196
      %p198 = pneg %p37
      %p199 = pneg %p34
      %p200 = pneg %p58
      %p201 = pneg %p55
      %p202 = pneg %p79
      %p203 = pneg %p76
      %p204 = pneg %p100
      %p205 = pneg %p97
      %p206 = pneg %p121
      %p207 = pneg %p118
      %p208 = pneg %p147
      %p209 = pneg %p144
      %p210 = scmp.lt.s32.totalorder %s16, 1
      %s211 = scalar_select %p210, %s16, 1
      %s212 = smul.addr %s211, 8
      %s213 = scalar_lea.vmem %s5, %s212
      %p214 = scmp.lt.s32.totalorder %s16, 1
      %s215 = scalar_select %p214, %s16, 1
      %s216 = smul.addr %s215, 6
      %s217 = smul.addr %s216, 4
      %s218 = scalar_lea.vmem %s0, %s217
      %p219 = scmp.lt.s32.totalorder %s16, 1
      %s220 = scalar_select %p219, %s16, 1
      %s221 = smul.addr %s220, 8
      %s222 = scalar_lea.vmem %s5, %s221
      %v224 = vld [vmem:[%s218] sm:$0xff]
      %v225 = vld [vmem:[%s218 + $0x8] sm:$0xff]
      %v226 = vld [vmem:[%s218 + $0x10] sm:$0xff]
      %v227 = vld [vmem:[%s1] sm:$0xff]
      %v228 = vld [vmem:[%s1 + $0x8] sm:$0xff]
      %v229 = vld [vmem:[%s1 + $0x10] sm:$0xff]
      %v230 = vld [vmem:[%s1 + $0x18] sm:$0xff]
      %v231 = vld [vmem:[%s1 + $0x20] sm:$0xff]
      %v232 = vld [vmem:[%s1 + $0x28] sm:$0xff]
      %v233 = vld [vmem:[%s1 + $0x30] sm:$0xff]
      %v234 = vld [vmem:[%s1 + $0x38] sm:$0xff]
      %v235 = vld [vmem:[%s1 + $0x40] sm:$0xff]
      %v236 = vld [vmem:[%s1 + $0x48] sm:$0xff]
      %v237 = vld [vmem:[%s1 + $0x50] sm:$0xff]
      %v238 = vld [vmem:[%s1 + $0x58] sm:$0xff]
      %v239 = vld [vmem:[%s1 + $0x60] sm:$0xff]
      %v240 = vld [vmem:[%s1 + $0x68] sm:$0xff]
      %v241 = vld [vmem:[%s1 + $0x70] sm:$0xff]
      %v242 = vld [vmem:[%s1 + $0x78] sm:$0xff]
      %v243 = vld [vmem:[%s1 + $0x80] sm:$0xff]
      %v244 = vld [vmem:[%s1 + $0x88] sm:$0xff]
      %v245 = vld [vmem:[%s1 + $0x90] sm:$0xff]
      %v246 = vld [vmem:[%s1 + $0x98] sm:$0xff]
      %v247 = vld [vmem:[%s1 + $0xa0] sm:$0xff]
      %v248 = vld [vmem:[%s1 + $0xa8] sm:$0xff]
      %v249 = vld [vmem:[%s1 + $0xb0] sm:$0xff]
      %v250 = vld [vmem:[%s1 + $0xb8] sm:$0xff]
      %v251 = vld [vmem:[%s1 + $0xc0] sm:$0xff]
      %v252 = vld [vmem:[%s1 + $0xc8] sm:$0xff]
      %v253 = vld [vmem:[%s1 + $0xd0] sm:$0xff]
      %v254 = vld [vmem:[%s1 + $0xd8] sm:$0xff]
      %v255 = vld [vmem:[%s1 + $0xe0] sm:$0xff]
      %v256 = vld [vmem:[%s1 + $0xe8] sm:$0xff]
      %v257 = vld [vmem:[%s1 + $0xf0] sm:$0xff]
      %v258 = vld [vmem:[%s1 + $0xf8] sm:$0xff]
      %v259 = vld [vmem:[%s1 + $0x100] sm:$0xff]
      %v260 = vld [vmem:[%s1 + $0x108] sm:$0xff]
      %v261 = vld [vmem:[%s1 + $0x110] sm:$0xff]
      %v262 = vld [vmem:[%s1 + $0x118] sm:$0xff]
      %v263 = vld [vmem:[%s1 + $0x120] sm:$0xff]
      %v264 = vld [vmem:[%s1 + $0x128] sm:$0xff]
      %v265 = vld [vmem:[%s1 + $0x130] sm:$0xff]
      %v266 = vld [vmem:[%s1 + $0x138] sm:$0xff]
      %v267 = vld [vmem:[%s1 + $0x140] sm:$0xff]
      %v268 = vld [vmem:[%s1 + $0x148] sm:$0xff]
      %v269 = vld [vmem:[%s1 + $0x150] sm:$0xff]
      %v270 = vld [vmem:[%s1 + $0x158] sm:$0xff]
      %v271 = vld [vmem:[%s1 + $0x160] sm:$0xff]
      %v272 = vld [vmem:[%s1 + $0x168] sm:$0xff]
      %v273 = vld [vmem:[%s1 + $0x170] sm:$0xff]
      %v274 = vld [vmem:[%s1 + $0x178] sm:$0xff]
      %v275 = vld [vmem:[%s1 + $0x180] sm:$0xff]
      %v276 = vld [vmem:[%s1 + $0x188] sm:$0xff]
      %v277 = vld [vmem:[%s1 + $0x190] sm:$0xff]
      %v278 = vld [vmem:[%s1 + $0x198] sm:$0xff]
      %v279 = vld [vmem:[%s1 + $0x1a0] sm:$0xff]
      %v280 = vld [vmem:[%s1 + $0x1a8] sm:$0xff]
      %v281 = vld [vmem:[%s1 + $0x1b0] sm:$0xff]
      %v282 = vld [vmem:[%s1 + $0x1b8] sm:$0xff]
      %v283 = vld [vmem:[%s1 + $0x1c0] sm:$0xff]
      %v284 = vld [vmem:[%s1 + $0x1c8] sm:$0xff]
      %v285 = vld [vmem:[%s1 + $0x1d0] sm:$0xff]
      %v286 = vld [vmem:[%s1 + $0x1d8] sm:$0xff]
      %v287 = vld [vmem:[%s1 + $0x1e0] sm:$0xff]
      %v288 = vld [vmem:[%s1 + $0x1e8] sm:$0xff]
      %v289 = vld [vmem:[%s1 + $0x1f0] sm:$0xff]
      %v290 = vld [vmem:[%s1 + $0x1f8] sm:$0xff]
      %v291 = vld [vmem:[%s1 + $0x200] sm:$0xff]
      %v292 = vld [vmem:[%s1 + $0x208] sm:$0xff]
      %v293 = vld [vmem:[%s1 + $0x210] sm:$0xff]
      %v294 = vld [vmem:[%s1 + $0x218] sm:$0xff]
      %v295 = vld [vmem:[%s1 + $0x220] sm:$0xff]
      %v296 = vld [vmem:[%s1 + $0x228] sm:$0xff]
      %v297 = vld [vmem:[%s1 + $0x230] sm:$0xff]
      %v298 = vld [vmem:[%s1 + $0x238] sm:$0xff]
      %v299 = vld [vmem:[%s1 + $0x240] sm:$0xff]
      %v300 = vld [vmem:[%s1 + $0x248] sm:$0xff]
      %v301 = vld [vmem:[%s1 + $0x250] sm:$0xff]
      %v302 = vld [vmem:[%s1 + $0x258] sm:$0xff]
      %v303 = vld [vmem:[%s1 + $0x260] sm:$0xff]
      %v304 = vld [vmem:[%s1 + $0x268] sm:$0xff]
      %v305 = vld [vmem:[%s1 + $0x270] sm:$0xff]
      %v306 = vld [vmem:[%s1 + $0x278] sm:$0xff]
      %v307 = vld [vmem:[%s1 + $0x280] sm:$0xff]
      %v308 = vld [vmem:[%s1 + $0x288] sm:$0xff]
      %v309 = vld [vmem:[%s1 + $0x290] sm:$0xff]
      %v310 = vld [vmem:[%s1 + $0x298] sm:$0xff]
      %v311 = vld [vmem:[%s1 + $0x2a0] sm:$0xff]
      %v312 = vld [vmem:[%s1 + $0x2a8] sm:$0xff]
      %v313 = vld [vmem:[%s1 + $0x2b0] sm:$0xff]
      %v314 = vld [vmem:[%s1 + $0x2b8] sm:$0xff]
      %v315 = vld [vmem:[%s1 + $0x2c0] sm:$0xff]
      %v316 = vld [vmem:[%s1 + $0x2c8] sm:$0xff]
      %v317 = vld [vmem:[%s1 + $0x2d0] sm:$0xff]
      %v318 = vld [vmem:[%s1 + $0x2d8] sm:$0xff]
      %v319 = vld [vmem:[%s1 + $0x2e0] sm:$0xff]
      %v320 = vld [vmem:[%s1 + $0x2e8] sm:$0xff]
      %v321 = vld [vmem:[%s1 + $0x2f0] sm:$0xff]
      %v322 = vld [vmem:[%s1 + $0x2f8] sm:$0xff]
      %v323 = vld [vmem:[%s1 + $0x300] sm:$0xff]
      %v324 = vld [vmem:[%s1 + $0x308] sm:$0xff]
      %v325 = vld [vmem:[%s1 + $0x310] sm:$0xff]
      %v326 = vld [vmem:[%s1 + $0x318] sm:$0xff]
      %v327 = vld [vmem:[%s1 + $0x320] sm:$0xff]
      %v328 = vld [vmem:[%s1 + $0x328] sm:$0xff]
      %v329 = vld [vmem:[%s1 + $0x330] sm:$0xff]
      %v330 = vld [vmem:[%s1 + $0x338] sm:$0xff]
      %v331 = vld [vmem:[%s1 + $0x340] sm:$0xff]
      %v332 = vld [vmem:[%s1 + $0x348] sm:$0xff]
      %v333 = vld [vmem:[%s1 + $0x350] sm:$0xff]
      %v334 = vld [vmem:[%s1 + $0x358] sm:$0xff]
      %v335 = vld [vmem:[%s1 + $0x360] sm:$0xff]
      %v336 = vld [vmem:[%s1 + $0x368] sm:$0xff]
      %v337 = vld [vmem:[%s1 + $0x370] sm:$0xff]
      %v338 = vld [vmem:[%s1 + $0x378] sm:$0xff]
      %v339 = vld [vmem:[%s1 + $0x380] sm:$0xff]
      %v340 = vld [vmem:[%s1 + $0x388] sm:$0xff]
      %v341 = vld [vmem:[%s1 + $0x390] sm:$0xff]
      %v342 = vld [vmem:[%s1 + $0x398] sm:$0xff]
      %v343 = vld [vmem:[%s1 + $0x3a0] sm:$0xff]
      %v344 = vld [vmem:[%s1 + $0x3a8] sm:$0xff]
      %v345 = vld [vmem:[%s1 + $0x3b0] sm:$0xff]
      %v346 = vld [vmem:[%s1 + $0x3b8] sm:$0xff]
      %v347 = vld [vmem:[%s1 + $0x3c0] sm:$0xff]
      %v348 = vld [vmem:[%s1 + $0x3c8] sm:$0xff]
      %v349 = vld [vmem:[%s1 + $0x3d0] sm:$0xff]
      %v350 = vld [vmem:[%s1 + $0x3d8] sm:$0xff]
      %v351 = vld [vmem:[%s1 + $0x3e0] sm:$0xff]
      %v352 = vld [vmem:[%s1 + $0x3e8] sm:$0xff]
      %v353 = vld [vmem:[%s1 + $0x3f0] sm:$0xff]
      %v354 = vld [vmem:[%s1 + $0x3f8] sm:$0xff]
      %v355 = vld [vmem:[%s1 + $0x400] sm:$0xff]
      %v356 = vld [vmem:[%s1 + $0x408] sm:$0xff]
      %v357 = vld [vmem:[%s1 + $0x410] sm:$0xff]
      %v358 = vld [vmem:[%s1 + $0x418] sm:$0xff]
      %v359 = vld [vmem:[%s1 + $0x420] sm:$0xff]
      %v360 = vld [vmem:[%s1 + $0x428] sm:$0xff]
      %v361 = vld [vmem:[%s1 + $0x430] sm:$0xff]
      %v362 = vld [vmem:[%s1 + $0x438] sm:$0xff]
      %v363 = vld [vmem:[%s1 + $0x440] sm:$0xff]
      %v364 = vld [vmem:[%s1 + $0x448] sm:$0xff]
      %v365 = vld [vmem:[%s1 + $0x450] sm:$0xff]
      %v366 = vld [vmem:[%s1 + $0x458] sm:$0xff]
      %v367 = vld [vmem:[%s1 + $0x460] sm:$0xff]
      %v368 = vld [vmem:[%s1 + $0x468] sm:$0xff]
      %v369 = vld [vmem:[%s1 + $0x470] sm:$0xff]
      %v370 = vld [vmem:[%s1 + $0x478] sm:$0xff]
      %v371 = vld [vmem:[%s1 + $0x480] sm:$0xff]
      %v372 = vld [vmem:[%s1 + $0x488] sm:$0xff]
      %v373 = vld [vmem:[%s1 + $0x490] sm:$0xff]
      %v374 = vld [vmem:[%s1 + $0x498] sm:$0xff]
      %v375 = vld [vmem:[%s1 + $0x4a0] sm:$0xff]
      %v376 = vld [vmem:[%s1 + $0x4a8] sm:$0xff]
      %v377 = vld [vmem:[%s1 + $0x4b0] sm:$0xff]
      %v378 = vld [vmem:[%s1 + $0x4b8] sm:$0xff]
      %v379 = vld [vmem:[%s1 + $0x4c0] sm:$0xff]
      %v380 = vld [vmem:[%s1 + $0x4c8] sm:$0xff]
      %v381 = vld [vmem:[%s1 + $0x4d0] sm:$0xff]
      %v382 = vld [vmem:[%s1 + $0x4d8] sm:$0xff]
      %v383 = vld [vmem:[%s1 + $0x4e0] sm:$0xff]
      %v384 = vld [vmem:[%s1 + $0x4e8] sm:$0xff]
      %v385 = vld [vmem:[%s1 + $0x4f0] sm:$0xff]
      %v386 = vld [vmem:[%s1 + $0x4f8] sm:$0xff]
      %v387 = vld [vmem:[%s1 + $0x500] sm:$0xff]
      %v388 = vld [vmem:[%s1 + $0x508] sm:$0xff]
      %v389 = vld [vmem:[%s1 + $0x510] sm:$0xff]
      %v390 = vld [vmem:[%s1 + $0x518] sm:$0xff]
      %v391 = vld [vmem:[%s1 + $0x520] sm:$0xff]
      %v392 = vld [vmem:[%s1 + $0x528] sm:$0xff]
      %v393 = vld [vmem:[%s1 + $0x530] sm:$0xff]
      %v394 = vld [vmem:[%s1 + $0x538] sm:$0xff]
      %v395 = vld [vmem:[%s1 + $0x540] sm:$0xff]
      %v396 = vld [vmem:[%s1 + $0x548] sm:$0xff]
      %v397 = vld [vmem:[%s1 + $0x550] sm:$0xff]
      %v398 = vld [vmem:[%s1 + $0x558] sm:$0xff]
      %v399 = vld [vmem:[%s1 + $0x560] sm:$0xff]
      %v400 = vld [vmem:[%s1 + $0x568] sm:$0xff]
      %v401 = vld [vmem:[%s1 + $0x570] sm:$0xff]
      %v402 = vld [vmem:[%s1 + $0x578] sm:$0xff]
      %v403 = vld [vmem:[%s1 + $0x580] sm:$0xff]
      %v404 = vld [vmem:[%s1 + $0x588] sm:$0xff]
      %v405 = vld [vmem:[%s1 + $0x590] sm:$0xff]
      %v406 = vld [vmem:[%s1 + $0x598] sm:$0xff]
      %v407 = vld [vmem:[%s1 + $0x5a0] sm:$0xff]
      %v408 = vld [vmem:[%s1 + $0x5a8] sm:$0xff]
      %v409 = vld [vmem:[%s1 + $0x5b0] sm:$0xff]
      %v410 = vld [vmem:[%s1 + $0x5b8] sm:$0xff]
      %v411 = vld [vmem:[%s1 + $0x5c0] sm:$0xff]
      %v412 = vld [vmem:[%s1 + $0x5c8] sm:$0xff]
      %v413 = vld [vmem:[%s1 + $0x5d0] sm:$0xff]
      %v414 = vld [vmem:[%s1 + $0x5d8] sm:$0xff]
      %v415 = vld [vmem:[%s1 + $0x5e0] sm:$0xff]
      %v416 = vld [vmem:[%s1 + $0x5e8] sm:$0xff]
      %v417 = vld [vmem:[%s1 + $0x5f0] sm:$0xff]
      %v418 = vld [vmem:[%s1 + $0x5f8] sm:$0xff]
      %v419 = vld [vmem:[%s2] sm:$0xf]
      %v421 = vlaneseq
      %v422 = vshrl.u32 %v421, 7
      %v423 = vsub.s32 0, %v422
      %v424 = vrot.slane %v419, %v423
      %v425 = vlaneseq
      %v426 = vshrl.u32 %v425, 7
      %v427 = vsub.s32 1, %v426
      %v428 = vrot.slane %v419, %v427
      %v429 = vlaneseq
      %v430 = vshrl.u32 %v429, 7
      %v431 = vsub.s32 2, %v430
      %v432 = vrot.slane %v419, %v431
      %v433 = vlaneseq
      %v434 = vshrl.u32 %v433, 7
      %v435 = vsub.s32 3, %v434
      %v436 = vrot.slane %v419, %v435
      %v444 = vunpack.c.l.b16 %v224
      %v445 = vunpack.c.h.b16 %v224
      %v446 = vunpack.c.l.b16 %v225
      %v447 = vunpack.c.h.b16 %v225
      %v448 = vunpack.c.l.b16 %v226
      %v449 = vunpack.c.h.b16 %v226
      %v450 = vpack.c.b16 %v444, %v444
      %v451 = vpack.c.b16 %v445, %v445
      %v452 = vpack.c.b16 %v446, %v446
      %v453 = vpack.c.b16 %v447, %v447
      %v454 = vpack.c.b16 %v448, %v448
      %v455 = vpack.c.b16 %v449, %v449
      %v654 = vunpack.c.l.b16 %v227
      %v655 = vunpack.c.h.b16 %v227
      %v656 = vunpack.c.l.b16 %v228
      %v657 = vunpack.c.h.b16 %v228
      %v658 = vunpack.c.l.b16 %v229
      %v659 = vunpack.c.h.b16 %v229
      %v660 = vunpack.c.l.b16 %v230
      %v661 = vunpack.c.h.b16 %v230
      %v662 = vunpack.c.l.b16 %v231
      %v663 = vunpack.c.h.b16 %v231
      %v664 = vunpack.c.l.b16 %v232
      %v665 = vunpack.c.h.b16 %v232
      %v666 = vunpack.c.l.b16 %v233
      %v667 = vunpack.c.h.b16 %v233
      %v668 = vunpack.c.l.b16 %v234
      %v669 = vunpack.c.h.b16 %v234
      %v670 = vunpack.c.l.b16 %v235
      %v671 = vunpack.c.h.b16 %v235
      %v672 = vunpack.c.l.b16 %v236
      %v673 = vunpack.c.h.b16 %v236
      %v674 = vunpack.c.l.b16 %v237
      %v675 = vunpack.c.h.b16 %v237
      %v676 = vunpack.c.l.b16 %v238
      %v677 = vunpack.c.h.b16 %v238
      %v678 = vunpack.c.l.b16 %v239
      %v679 = vunpack.c.h.b16 %v239
      %v680 = vunpack.c.l.b16 %v240
      %v681 = vunpack.c.h.b16 %v240
      %v682 = vunpack.c.l.b16 %v241
      %v683 = vunpack.c.h.b16 %v241
      %v684 = vunpack.c.l.b16 %v242
      %v685 = vunpack.c.h.b16 %v242
      %v686 = vunpack.c.l.b16 %v243
      %v687 = vunpack.c.h.b16 %v243
      %v688 = vunpack.c.l.b16 %v244
      %v689 = vunpack.c.h.b16 %v244
      %v690 = vunpack.c.l.b16 %v245
      %v691 = vunpack.c.h.b16 %v245
      %v692 = vunpack.c.l.b16 %v246
      %v693 = vunpack.c.h.b16 %v246
      %v694 = vunpack.c.l.b16 %v247
      %v695 = vunpack.c.h.b16 %v247
      %v696 = vunpack.c.l.b16 %v248
      %v697 = vunpack.c.h.b16 %v248
      %v698 = vunpack.c.l.b16 %v249
      %v699 = vunpack.c.h.b16 %v249
      %v700 = vunpack.c.l.b16 %v250
      %v701 = vunpack.c.h.b16 %v250
      %v702 = vunpack.c.l.b16 %v251
      %v703 = vunpack.c.h.b16 %v251
      %v704 = vunpack.c.l.b16 %v252
      %v705 = vunpack.c.h.b16 %v252
      %v706 = vunpack.c.l.b16 %v253
      %v707 = vunpack.c.h.b16 %v253
      %v708 = vunpack.c.l.b16 %v254
      %v709 = vunpack.c.h.b16 %v254
      %v710 = vunpack.c.l.b16 %v255
      %v711 = vunpack.c.h.b16 %v255
      %v712 = vunpack.c.l.b16 %v256
      %v713 = vunpack.c.h.b16 %v256
      %v714 = vunpack.c.l.b16 %v257
      %v715 = vunpack.c.h.b16 %v257
      %v716 = vunpack.c.l.b16 %v258
      %v717 = vunpack.c.h.b16 %v258
      %v718 = vunpack.c.l.b16 %v259
      %v719 = vunpack.c.h.b16 %v259
      %v720 = vunpack.c.l.b16 %v260
      %v721 = vunpack.c.h.b16 %v260
      %v722 = vunpack.c.l.b16 %v261
      %v723 = vunpack.c.h.b16 %v261
      %v724 = vunpack.c.l.b16 %v262
      %v725 = vunpack.c.h.b16 %v262
      %v726 = vunpack.c.l.b16 %v263
      %v727 = vunpack.c.h.b16 %v263
      %v728 = vunpack.c.l.b16 %v264
      %v729 = vunpack.c.h.b16 %v264
      %v730 = vunpack.c.l.b16 %v265
      %v731 = vunpack.c.h.b16 %v265
      %v732 = vunpack.c.l.b16 %v266
      %v733 = vunpack.c.h.b16 %v266
      %v734 = vunpack.c.l.b16 %v267
      %v735 = vunpack.c.h.b16 %v267
      %v736 = vunpack.c.l.b16 %v268
      %v737 = vunpack.c.h.b16 %v268
      %v738 = vunpack.c.l.b16 %v269
      %v739 = vunpack.c.h.b16 %v269
      %v740 = vunpack.c.l.b16 %v270
      %v741 = vunpack.c.h.b16 %v270
      %v742 = vunpack.c.l.b16 %v271
      %v743 = vunpack.c.h.b16 %v271
      %v744 = vunpack.c.l.b16 %v272
      %v745 = vunpack.c.h.b16 %v272
      %v746 = vunpack.c.l.b16 %v273
      %v747 = vunpack.c.h.b16 %v273
      %v748 = vunpack.c.l.b16 %v274
      %v749 = vunpack.c.h.b16 %v274
      %v750 = vunpack.c.l.b16 %v275
      %v751 = vunpack.c.h.b16 %v275
      %v752 = vunpack.c.l.b16 %v276
      %v753 = vunpack.c.h.b16 %v276
      %v754 = vunpack.c.l.b16 %v277
      %v755 = vunpack.c.h.b16 %v277
      %v756 = vunpack.c.l.b16 %v278
      %v757 = vunpack.c.h.b16 %v278
      %v758 = vunpack.c.l.b16 %v279
      %v759 = vunpack.c.h.b16 %v279
      %v760 = vunpack.c.l.b16 %v280
      %v761 = vunpack.c.h.b16 %v280
      %v762 = vunpack.c.l.b16 %v281
      %v763 = vunpack.c.h.b16 %v281
      %v764 = vunpack.c.l.b16 %v282
      %v765 = vunpack.c.h.b16 %v282
      %v766 = vunpack.c.l.b16 %v283
      %v767 = vunpack.c.h.b16 %v283
      %v768 = vunpack.c.l.b16 %v284
      %v769 = vunpack.c.h.b16 %v284
      %v770 = vunpack.c.l.b16 %v285
      %v771 = vunpack.c.h.b16 %v285
      %v772 = vunpack.c.l.b16 %v286
      %v773 = vunpack.c.h.b16 %v286
      %v774 = vunpack.c.l.b16 %v287
      %v775 = vunpack.c.h.b16 %v287
      %v776 = vunpack.c.l.b16 %v288
      %v777 = vunpack.c.h.b16 %v288
      %v778 = vunpack.c.l.b16 %v289
      %v779 = vunpack.c.h.b16 %v289
      %v780 = vunpack.c.l.b16 %v290
      %v781 = vunpack.c.h.b16 %v290
      %v782 = vunpack.c.l.b16 %v291
      %v783 = vunpack.c.h.b16 %v291
      %v784 = vunpack.c.l.b16 %v292
      %v785 = vunpack.c.h.b16 %v292
      %v786 = vunpack.c.l.b16 %v293
      %v787 = vunpack.c.h.b16 %v293
      %v788 = vunpack.c.l.b16 %v294
      %v789 = vunpack.c.h.b16 %v294
      %v790 = vunpack.c.l.b16 %v295
      %v791 = vunpack.c.h.b16 %v295
      %v792 = vunpack.c.l.b16 %v296
      %v793 = vunpack.c.h.b16 %v296
      %v794 = vunpack.c.l.b16 %v297
      %v795 = vunpack.c.h.b16 %v297
      %v796 = vunpack.c.l.b16 %v298
      %v797 = vunpack.c.h.b16 %v298
      %v798 = vunpack.c.l.b16 %v299
      %v799 = vunpack.c.h.b16 %v299
      %v800 = vunpack.c.l.b16 %v300
      %v801 = vunpack.c.h.b16 %v300
      %v802 = vunpack.c.l.b16 %v301
      %v803 = vunpack.c.h.b16 %v301
      %v804 = vunpack.c.l.b16 %v302
      %v805 = vunpack.c.h.b16 %v302
      %v806 = vunpack.c.l.b16 %v303
      %v807 = vunpack.c.h.b16 %v303
      %v808 = vunpack.c.l.b16 %v304
      %v809 = vunpack.c.h.b16 %v304
      %v810 = vunpack.c.l.b16 %v305
      %v811 = vunpack.c.h.b16 %v305
      %v812 = vunpack.c.l.b16 %v306
      %v813 = vunpack.c.h.b16 %v306
      %v814 = vunpack.c.l.b16 %v307
      %v815 = vunpack.c.h.b16 %v307
      %v816 = vunpack.c.l.b16 %v308
      %v817 = vunpack.c.h.b16 %v308
      %v818 = vunpack.c.l.b16 %v309
      %v819 = vunpack.c.h.b16 %v309
      %v820 = vunpack.c.l.b16 %v310
      %v821 = vunpack.c.h.b16 %v310
      %v822 = vunpack.c.l.b16 %v311
      %v823 = vunpack.c.h.b16 %v311
      %v824 = vunpack.c.l.b16 %v312
      %v825 = vunpack.c.h.b16 %v312
      %v826 = vunpack.c.l.b16 %v313
      %v827 = vunpack.c.h.b16 %v313
      %v828 = vunpack.c.l.b16 %v314
      %v829 = vunpack.c.h.b16 %v314
      %v830 = vunpack.c.l.b16 %v315
      %v831 = vunpack.c.h.b16 %v315
      %v832 = vunpack.c.l.b16 %v316
      %v833 = vunpack.c.h.b16 %v316
      %v834 = vunpack.c.l.b16 %v317
      %v835 = vunpack.c.h.b16 %v317
      %v836 = vunpack.c.l.b16 %v318
      %v837 = vunpack.c.h.b16 %v318
      %v838 = vunpack.c.l.b16 %v319
      %v839 = vunpack.c.h.b16 %v319
      %v840 = vunpack.c.l.b16 %v320
      %v841 = vunpack.c.h.b16 %v320
      %v842 = vunpack.c.l.b16 %v321
      %v843 = vunpack.c.h.b16 %v321
      %v844 = vunpack.c.l.b16 %v322
      %v845 = vunpack.c.h.b16 %v322
      %v846 = vunpack.c.l.b16 %v323
      %v847 = vunpack.c.h.b16 %v323
      %v848 = vunpack.c.l.b16 %v324
      %v849 = vunpack.c.h.b16 %v324
      %v850 = vunpack.c.l.b16 %v325
      %v851 = vunpack.c.h.b16 %v325
      %v852 = vunpack.c.l.b16 %v326
      %v853 = vunpack.c.h.b16 %v326
      %v854 = vunpack.c.l.b16 %v327
      %v855 = vunpack.c.h.b16 %v327
      %v856 = vunpack.c.l.b16 %v328
      %v857 = vunpack.c.h.b16 %v328
      %v858 = vunpack.c.l.b16 %v329
      %v859 = vunpack.c.h.b16 %v329
      %v860 = vunpack.c.l.b16 %v330
      %v861 = vunpack.c.h.b16 %v330
      %v862 = vunpack.c.l.b16 %v331
      %v863 = vunpack.c.h.b16 %v331
      %v864 = vunpack.c.l.b16 %v332
      %v865 = vunpack.c.h.b16 %v332
      %v866 = vunpack.c.l.b16 %v333
      %v867 = vunpack.c.h.b16 %v333
      %v868 = vunpack.c.l.b16 %v334
      %v869 = vunpack.c.h.b16 %v334
      %v870 = vunpack.c.l.b16 %v335
      %v871 = vunpack.c.h.b16 %v335
      %v872 = vunpack.c.l.b16 %v336
      %v873 = vunpack.c.h.b16 %v336
      %v874 = vunpack.c.l.b16 %v337
      %v875 = vunpack.c.h.b16 %v337
      %v876 = vunpack.c.l.b16 %v338
      %v877 = vunpack.c.h.b16 %v338
      %v878 = vunpack.c.l.b16 %v339
      %v879 = vunpack.c.h.b16 %v339
      %v880 = vunpack.c.l.b16 %v340
      %v881 = vunpack.c.h.b16 %v340
      %v882 = vunpack.c.l.b16 %v341
      %v883 = vunpack.c.h.b16 %v341
      %v884 = vunpack.c.l.b16 %v342
      %v885 = vunpack.c.h.b16 %v342
      %v886 = vunpack.c.l.b16 %v343
      %v887 = vunpack.c.h.b16 %v343
      %v888 = vunpack.c.l.b16 %v344
      %v889 = vunpack.c.h.b16 %v344
      %v890 = vunpack.c.l.b16 %v345
      %v891 = vunpack.c.h.b16 %v345
      %v892 = vunpack.c.l.b16 %v346
      %v893 = vunpack.c.h.b16 %v346
      %v894 = vunpack.c.l.b16 %v347
      %v895 = vunpack.c.h.b16 %v347
      %v896 = vunpack.c.l.b16 %v348
      %v897 = vunpack.c.h.b16 %v348
      %v898 = vunpack.c.l.b16 %v349
      %v899 = vunpack.c.h.b16 %v349
      %v900 = vunpack.c.l.b16 %v350
      %v901 = vunpack.c.h.b16 %v350
      %v902 = vunpack.c.l.b16 %v351
      %v903 = vunpack.c.h.b16 %v351
      %v904 = vunpack.c.l.b16 %v352
      %v905 = vunpack.c.h.b16 %v352
      %v906 = vunpack.c.l.b16 %v353
      %v907 = vunpack.c.h.b16 %v353
      %v908 = vunpack.c.l.b16 %v354
      %v909 = vunpack.c.h.b16 %v354
      %v910 = vunpack.c.l.b16 %v355
      %v911 = vunpack.c.h.b16 %v355
      %v912 = vunpack.c.l.b16 %v356
      %v913 = vunpack.c.h.b16 %v356
      %v914 = vunpack.c.l.b16 %v357
      %v915 = vunpack.c.h.b16 %v357
      %v916 = vunpack.c.l.b16 %v358
      %v917 = vunpack.c.h.b16 %v358
      %v918 = vunpack.c.l.b16 %v359
      %v919 = vunpack.c.h.b16 %v359
      %v920 = vunpack.c.l.b16 %v360
      %v921 = vunpack.c.h.b16 %v360
      %v922 = vunpack.c.l.b16 %v361
      %v923 = vunpack.c.h.b16 %v361
      %v924 = vunpack.c.l.b16 %v362
      %v925 = vunpack.c.h.b16 %v362
      %v926 = vunpack.c.l.b16 %v363
      %v927 = vunpack.c.h.b16 %v363
      %v928 = vunpack.c.l.b16 %v364
      %v929 = vunpack.c.h.b16 %v364
      %v930 = vunpack.c.l.b16 %v365
      %v931 = vunpack.c.h.b16 %v365
      %v932 = vunpack.c.l.b16 %v366
      %v933 = vunpack.c.h.b16 %v366
      %v934 = vunpack.c.l.b16 %v367
      %v935 = vunpack.c.h.b16 %v367
      %v936 = vunpack.c.l.b16 %v368
      %v937 = vunpack.c.h.b16 %v368
      %v938 = vunpack.c.l.b16 %v369
      %v939 = vunpack.c.h.b16 %v369
      %v940 = vunpack.c.l.b16 %v370
      %v941 = vunpack.c.h.b16 %v370
      %v942 = vunpack.c.l.b16 %v371
      %v943 = vunpack.c.h.b16 %v371
      %v944 = vunpack.c.l.b16 %v372
      %v945 = vunpack.c.h.b16 %v372
      %v946 = vunpack.c.l.b16 %v373
      %v947 = vunpack.c.h.b16 %v373
      %v948 = vunpack.c.l.b16 %v374
      %v949 = vunpack.c.h.b16 %v374
      %v950 = vunpack.c.l.b16 %v375
      %v951 = vunpack.c.h.b16 %v375
      %v952 = vunpack.c.l.b16 %v376
      %v953 = vunpack.c.h.b16 %v376
      %v954 = vunpack.c.l.b16 %v377
      %v955 = vunpack.c.h.b16 %v377
      %v956 = vunpack.c.l.b16 %v378
      %v957 = vunpack.c.h.b16 %v378
      %v958 = vunpack.c.l.b16 %v379
      %v959 = vunpack.c.h.b16 %v379
      %v960 = vunpack.c.l.b16 %v380
      %v961 = vunpack.c.h.b16 %v380
      %v962 = vunpack.c.l.b16 %v381
      %v963 = vunpack.c.h.b16 %v381
      %v964 = vunpack.c.l.b16 %v382
      %v965 = vunpack.c.h.b16 %v382
      %v966 = vunpack.c.l.b16 %v383
      %v967 = vunpack.c.h.b16 %v383
      %v968 = vunpack.c.l.b16 %v384
      %v969 = vunpack.c.h.b16 %v384
      %v970 = vunpack.c.l.b16 %v385
      %v971 = vunpack.c.h.b16 %v385
      %v972 = vunpack.c.l.b16 %v386
      %v973 = vunpack.c.h.b16 %v386
      %v974 = vunpack.c.l.b16 %v387
      %v975 = vunpack.c.h.b16 %v387
      %v976 = vunpack.c.l.b16 %v388
      %v977 = vunpack.c.h.b16 %v388
      %v978 = vunpack.c.l.b16 %v389
      %v979 = vunpack.c.h.b16 %v389
      %v980 = vunpack.c.l.b16 %v390
      %v981 = vunpack.c.h.b16 %v390
      %v982 = vunpack.c.l.b16 %v391
      %v983 = vunpack.c.h.b16 %v391
      %v984 = vunpack.c.l.b16 %v392
      %v985 = vunpack.c.h.b16 %v392
      %v986 = vunpack.c.l.b16 %v393
      %v987 = vunpack.c.h.b16 %v393
      %v988 = vunpack.c.l.b16 %v394
      %v989 = vunpack.c.h.b16 %v394
      %v990 = vunpack.c.l.b16 %v395
      %v991 = vunpack.c.h.b16 %v395
      %v992 = vunpack.c.l.b16 %v396
      %v993 = vunpack.c.h.b16 %v396
      %v994 = vunpack.c.l.b16 %v397
      %v995 = vunpack.c.h.b16 %v397
      %v996 = vunpack.c.l.b16 %v398
      %v997 = vunpack.c.h.b16 %v398
      %v998 = vunpack.c.l.b16 %v399
      %v999 = vunpack.c.h.b16 %v399
      %v1000 = vunpack.c.l.b16 %v400
      %v1001 = vunpack.c.h.b16 %v400
      %v1002 = vunpack.c.l.b16 %v401
      %v1003 = vunpack.c.h.b16 %v401
      %v1004 = vunpack.c.l.b16 %v402
      %v1005 = vunpack.c.h.b16 %v402
      %v1006 = vunpack.c.l.b16 %v403
      %v1007 = vunpack.c.h.b16 %v403
      %v1008 = vunpack.c.l.b16 %v404
      %v1009 = vunpack.c.h.b16 %v404
      %v1010 = vunpack.c.l.b16 %v405
      %v1011 = vunpack.c.h.b16 %v405
      %v1012 = vunpack.c.l.b16 %v406
      %v1013 = vunpack.c.h.b16 %v406
      %v1014 = vunpack.c.l.b16 %v407
      %v1015 = vunpack.c.h.b16 %v407
      %v1016 = vunpack.c.l.b16 %v408
      %v1017 = vunpack.c.h.b16 %v408
      %v1018 = vunpack.c.l.b16 %v409
      %v1019 = vunpack.c.h.b16 %v409
      %v1020 = vunpack.c.l.b16 %v410
      %v1021 = vunpack.c.h.b16 %v410
      %v1022 = vunpack.c.l.b16 %v411
      %v1023 = vunpack.c.h.b16 %v411
      %v1024 = vunpack.c.l.b16 %v412
      %v1025 = vunpack.c.h.b16 %v412
      %v1026 = vunpack.c.l.b16 %v413
      %v1027 = vunpack.c.h.b16 %v413
      %v1028 = vunpack.c.l.b16 %v414
      %v1029 = vunpack.c.h.b16 %v414
      %v1030 = vunpack.c.l.b16 %v415
      %v1031 = vunpack.c.h.b16 %v415
      %v1032 = vunpack.c.l.b16 %v416
      %v1033 = vunpack.c.h.b16 %v416
      %v1034 = vunpack.c.l.b16 %v417
      %v1035 = vunpack.c.h.b16 %v417
      %v1036 = vunpack.c.l.b16 %v418
      %v1037 = vunpack.c.h.b16 %v418
      %v1038 = vpack.c.b16 %v658, %v654
      %v1039 = vpack.c.b16 %v659, %v655
      %v1040 = vpack.c.b16 %v660, %v656
      %v1041 = vpack.c.b16 %v661, %v657
      %v1042 = vpack.c.b16 %v666, %v662
      %v1043 = vpack.c.b16 %v667, %v663
      %v1044 = vpack.c.b16 %v668, %v664
      %v1045 = vpack.c.b16 %v669, %v665
      %v1046 = vpack.c.b16 %v674, %v670
      %v1047 = vpack.c.b16 %v675, %v671
      %v1048 = vpack.c.b16 %v676, %v672
      %v1049 = vpack.c.b16 %v677, %v673
      %v1050 = vpack.c.b16 %v682, %v678
      %v1051 = vpack.c.b16 %v683, %v679
      %v1052 = vpack.c.b16 %v684, %v680
      %v1053 = vpack.c.b16 %v685, %v681
      %v1054 = vpack.c.b16 %v690, %v686
      %v1055 = vpack.c.b16 %v691, %v687
      %v1056 = vpack.c.b16 %v692, %v688
      %v1057 = vpack.c.b16 %v693, %v689
      %v1058 = vpack.c.b16 %v698, %v694
      %v1059 = vpack.c.b16 %v699, %v695
      %v1060 = vpack.c.b16 %v700, %v696
      %v1061 = vpack.c.b16 %v701, %v697
      %v1062 = vpack.c.b16 %v706, %v702
      %v1063 = vpack.c.b16 %v707, %v703
      %v1064 = vpack.c.b16 %v708, %v704
      %v1065 = vpack.c.b16 %v709, %v705
      %v1066 = vpack.c.b16 %v714, %v710
      %v1067 = vpack.c.b16 %v715, %v711
      %v1068 = vpack.c.b16 %v716, %v712
      %v1069 = vpack.c.b16 %v717, %v713
      %v1070 = vpack.c.b16 %v722, %v718
      %v1071 = vpack.c.b16 %v723, %v719
      %v1072 = vpack.c.b16 %v724, %v720
      %v1073 = vpack.c.b16 %v725, %v721
      %v1074 = vpack.c.b16 %v730, %v726
      %v1075 = vpack.c.b16 %v731, %v727
      %v1076 = vpack.c.b16 %v732, %v728
      %v1077 = vpack.c.b16 %v733, %v729
      %v1078 = vpack.c.b16 %v738, %v734
      %v1079 = vpack.c.b16 %v739, %v735
      %v1080 = vpack.c.b16 %v740, %v736
      %v1081 = vpack.c.b16 %v741, %v737
      %v1082 = vpack.c.b16 %v746, %v742
      %v1083 = vpack.c.b16 %v747, %v743
      %v1084 = vpack.c.b16 %v748, %v744
      %v1085 = vpack.c.b16 %v749, %v745
      %v1086 = vpack.c.b16 %v754, %v750
      %v1087 = vpack.c.b16 %v755, %v751
      %v1088 = vpack.c.b16 %v756, %v752
      %v1089 = vpack.c.b16 %v757, %v753
      %v1090 = vpack.c.b16 %v762, %v758
      %v1091 = vpack.c.b16 %v763, %v759
      %v1092 = vpack.c.b16 %v764, %v760
      %v1093 = vpack.c.b16 %v765, %v761
      %v1094 = vpack.c.b16 %v770, %v766
      %v1095 = vpack.c.b16 %v771, %v767
      %v1096 = vpack.c.b16 %v772, %v768
      %v1097 = vpack.c.b16 %v773, %v769
      %v1098 = vpack.c.b16 %v778, %v774
      %v1099 = vpack.c.b16 %v779, %v775
      %v1100 = vpack.c.b16 %v780, %v776
      %v1101 = vpack.c.b16 %v781, %v777
      %v1102 = vpack.c.b16 %v786, %v782
      %v1103 = vpack.c.b16 %v787, %v783
      %v1104 = vpack.c.b16 %v788, %v784
      %v1105 = vpack.c.b16 %v789, %v785
      %v1106 = vpack.c.b16 %v794, %v790
      %v1107 = vpack.c.b16 %v795, %v791
      %v1108 = vpack.c.b16 %v796, %v792
      %v1109 = vpack.c.b16 %v797, %v793
      %v1110 = vpack.c.b16 %v802, %v798
      %v1111 = vpack.c.b16 %v803, %v799
      %v1112 = vpack.c.b16 %v804, %v800
      %v1113 = vpack.c.b16 %v805, %v801
      %v1114 = vpack.c.b16 %v810, %v806
      %v1115 = vpack.c.b16 %v811, %v807
      %v1116 = vpack.c.b16 %v812, %v808
      %v1117 = vpack.c.b16 %v813, %v809
      %v1118 = vpack.c.b16 %v818, %v814
      %v1119 = vpack.c.b16 %v819, %v815
      %v1120 = vpack.c.b16 %v820, %v816
      %v1121 = vpack.c.b16 %v821, %v817
      %v1122 = vpack.c.b16 %v826, %v822
      %v1123 = vpack.c.b16 %v827, %v823
      %v1124 = vpack.c.b16 %v828, %v824
      %v1125 = vpack.c.b16 %v829, %v825
      %v1126 = vpack.c.b16 %v834, %v830
      %v1127 = vpack.c.b16 %v835, %v831
      %v1128 = vpack.c.b16 %v836, %v832
      %v1129 = vpack.c.b16 %v837, %v833
      %v1130 = vpack.c.b16 %v842, %v838
      %v1131 = vpack.c.b16 %v843, %v839
      %v1132 = vpack.c.b16 %v844, %v840
      %v1133 = vpack.c.b16 %v845, %v841
      %v1134 = vpack.c.b16 %v850, %v846
      %v1135 = vpack.c.b16 %v851, %v847
      %v1136 = vpack.c.b16 %v852, %v848
      %v1137 = vpack.c.b16 %v853, %v849
      %v1138 = vpack.c.b16 %v858, %v854
      %v1139 = vpack.c.b16 %v859, %v855
      %v1140 = vpack.c.b16 %v860, %v856
      %v1141 = vpack.c.b16 %v861, %v857
      %v1142 = vpack.c.b16 %v866, %v862
      %v1143 = vpack.c.b16 %v867, %v863
      %v1144 = vpack.c.b16 %v868, %v864
      %v1145 = vpack.c.b16 %v869, %v865
      %v1146 = vpack.c.b16 %v874, %v870
      %v1147 = vpack.c.b16 %v875, %v871
      %v1148 = vpack.c.b16 %v876, %v872
      %v1149 = vpack.c.b16 %v877, %v873
      %v1150 = vpack.c.b16 %v882, %v878
      %v1151 = vpack.c.b16 %v883, %v879
      %v1152 = vpack.c.b16 %v884, %v880
      %v1153 = vpack.c.b16 %v885, %v881
      %v1154 = vpack.c.b16 %v890, %v886
      %v1155 = vpack.c.b16 %v891, %v887
      %v1156 = vpack.c.b16 %v892, %v888
      %v1157 = vpack.c.b16 %v893, %v889
      %v1158 = vpack.c.b16 %v898, %v894
      %v1159 = vpack.c.b16 %v899, %v895
      %v1160 = vpack.c.b16 %v900, %v896
      %v1161 = vpack.c.b16 %v901, %v897
      %v1162 = vpack.c.b16 %v906, %v902
      %v1163 = vpack.c.b16 %v907, %v903
      %v1164 = vpack.c.b16 %v908, %v904
      %v1165 = vpack.c.b16 %v909, %v905
      %v1166 = vpack.c.b16 %v914, %v910
      %v1167 = vpack.c.b16 %v915, %v911
      %v1168 = vpack.c.b16 %v916, %v912
      %v1169 = vpack.c.b16 %v917, %v913
      %v1170 = vpack.c.b16 %v922, %v918
      %v1171 = vpack.c.b16 %v923, %v919
      %v1172 = vpack.c.b16 %v924, %v920
      %v1173 = vpack.c.b16 %v925, %v921
      %v1174 = vpack.c.b16 %v930, %v926
      %v1175 = vpack.c.b16 %v931, %v927
      %v1176 = vpack.c.b16 %v932, %v928
      %v1177 = vpack.c.b16 %v933, %v929
      %v1178 = vpack.c.b16 %v938, %v934
      %v1179 = vpack.c.b16 %v939, %v935
      %v1180 = vpack.c.b16 %v940, %v936
      %v1181 = vpack.c.b16 %v941, %v937
      %v1182 = vpack.c.b16 %v946, %v942
      %v1183 = vpack.c.b16 %v947, %v943
      %v1184 = vpack.c.b16 %v948, %v944
      %v1185 = vpack.c.b16 %v949, %v945
      %v1186 = vpack.c.b16 %v954, %v950
      %v1187 = vpack.c.b16 %v955, %v951
      %v1188 = vpack.c.b16 %v956, %v952
      %v1189 = vpack.c.b16 %v957, %v953
      %v1190 = vpack.c.b16 %v962, %v958
      %v1191 = vpack.c.b16 %v963, %v959
      %v1192 = vpack.c.b16 %v964, %v960
      %v1193 = vpack.c.b16 %v965, %v961
      %v1194 = vpack.c.b16 %v970, %v966
      %v1195 = vpack.c.b16 %v971, %v967
      %v1196 = vpack.c.b16 %v972, %v968
      %v1197 = vpack.c.b16 %v973, %v969
      %v1198 = vpack.c.b16 %v978, %v974
      %v1199 = vpack.c.b16 %v979, %v975
      %v1200 = vpack.c.b16 %v980, %v976
      %v1201 = vpack.c.b16 %v981, %v977
      %v1202 = vpack.c.b16 %v986, %v982
      %v1203 = vpack.c.b16 %v987, %v983
      %v1204 = vpack.c.b16 %v988, %v984
      %v1205 = vpack.c.b16 %v989, %v985
      %v1206 = vpack.c.b16 %v994, %v990
      %v1207 = vpack.c.b16 %v995, %v991
      %v1208 = vpack.c.b16 %v996, %v992
      %v1209 = vpack.c.b16 %v997, %v993
      %v1210 = vpack.c.b16 %v1002, %v998
      %v1211 = vpack.c.b16 %v1003, %v999
      %v1212 = vpack.c.b16 %v1004, %v1000
      %v1213 = vpack.c.b16 %v1005, %v1001
      %v1214 = vpack.c.b16 %v1010, %v1006
      %v1215 = vpack.c.b16 %v1011, %v1007
      %v1216 = vpack.c.b16 %v1012, %v1008
      %v1217 = vpack.c.b16 %v1013, %v1009
      %v1218 = vpack.c.b16 %v1018, %v1014
      %v1219 = vpack.c.b16 %v1019, %v1015
      %v1220 = vpack.c.b16 %v1020, %v1016
      %v1221 = vpack.c.b16 %v1021, %v1017
      %v1222 = vpack.c.b16 %v1026, %v1022
      %v1223 = vpack.c.b16 %v1027, %v1023
      %v1224 = vpack.c.b16 %v1028, %v1024
      %v1225 = vpack.c.b16 %v1029, %v1025
      %v1226 = vpack.c.b16 %v1034, %v1030
      %v1227 = vpack.c.b16 %v1035, %v1031
      %v1228 = vpack.c.b16 %v1036, %v1032
      %v1229 = vpack.c.b16 %v1037, %v1033
      %1422 = vmatprep.subr.bf16.mxu0 %v1039
      %1423 = vmatpush1.bf16.msra.mxu0 %v1038
      %1424 = vmatprep.subr.bf16.mxu0 %v1043
      %1425 = vmatpush1.bf16.msra.mxu0 %v1042
      %1426 = vmatprep.subr.bf16.mxu0 %v1047
      %1427 = vmatpush1.bf16.msra.mxu0 %v1046
      %1428 = vmatprep.subr.bf16.mxu0 %v1051
      %1429 = vmatpush1.bf16.msra.mxu0 %v1050
      %1430 = vmatprep.subr.bf16.mxu0 %v1055
      %1431 = vmatpush1.bf16.msra.mxu0 %v1054
      %1432 = vmatprep.subr.bf16.mxu0 %v1059
      %1433 = vmatpush1.bf16.msra.mxu0 %v1058
      %1434 = vmatprep.subr.bf16.mxu0 %v1063
      %1435 = vmatpush1.bf16.msra.mxu0 %v1062
      %1436 = vmatprep.subr.bf16.mxu0 %v1067
      %1437 = vmatpush1.bf16.msra.mxu0 %v1066
      %1438 = vmatprep.subr.bf16.mxu0 %v1071
      %1439 = vmatpush1.bf16.msra.mxu0 %v1070
      %1440 = vmatprep.subr.bf16.mxu0 %v1075
      %1441 = vmatpush1.bf16.msra.mxu0 %v1074
      %1442 = vmatprep.subr.bf16.mxu0 %v1079
      %1443 = vmatpush1.bf16.msra.mxu0 %v1078
      %1444 = vmatprep.subr.bf16.mxu0 %v1083
      %1445 = vmatpush1.bf16.msra.mxu0 %v1082
      %1446 = vmatprep.subr.bf16.mxu0 %v1087
      %1447 = vmatpush1.bf16.msra.mxu0 %v1086
      %1448 = vmatprep.subr.bf16.mxu0 %v1091
      %1449 = vmatpush1.bf16.msra.mxu0 %v1090
      %1450 = vmatprep.subr.bf16.mxu0 %v1095
      %1451 = vmatpush1.bf16.msra.mxu0 %v1094
      %1452 = vmatprep.subr.bf16.mxu0 %v1099
      %1453 = vmatpush1.bf16.msra.mxu0 %v1098
      %1454 = vmatprep.mubr.bf16.mxu0 %v451
      %1455 = vmatmul.mubr.bf16.gmra.mrb[0].mxu0 %v450
      %v1456 = vpop.f32.mrb[0].mxu0
      %v1457 = vadd.f32 %v424, %v1456
      %v1458 = vpop.f32.mrb[0].mxu0
      %v1459 = vadd.f32 %v428, %v1458
      %v1460 = vpop.f32.mrb[0].mxu0
      %v1461 = vpop.f32.mrb[0].mxu0
      %1462 = vdwg.mxu0
      %1463 = vmatprep.subr.bf16.mxu0 %v1103
      %1464 = vmatpush1.bf16.msra.mxu0 %v1102
      %1465 = vmatprep.subr.bf16.mxu0 %v1107
      %1466 = vmatpush1.bf16.msra.mxu0 %v1106
      %1467 = vmatprep.subr.bf16.mxu0 %v1111
      %1468 = vmatpush1.bf16.msra.mxu0 %v1110
      %1469 = vmatprep.subr.bf16.mxu0 %v1115
      %1470 = vmatpush1.bf16.msra.mxu0 %v1114
      %1471 = vmatprep.subr.bf16.mxu0 %v1119
      %1472 = vmatpush1.bf16.msra.mxu0 %v1118
      %1473 = vmatprep.subr.bf16.mxu0 %v1123
      %1474 = vmatpush1.bf16.msra.mxu0 %v1122
      %1475 = vmatprep.subr.bf16.mxu0 %v1127
      %1476 = vmatpush1.bf16.msra.mxu0 %v1126
      %1477 = vmatprep.subr.bf16.mxu0 %v1131
      %1478 = vmatpush1.bf16.msra.mxu0 %v1130
      %1479 = vmatprep.subr.bf16.mxu0 %v1135
      %1480 = vmatpush1.bf16.msra.mxu0 %v1134
      %1481 = vmatprep.subr.bf16.mxu0 %v1139
      %1482 = vmatpush1.bf16.msra.mxu0 %v1138
      %1483 = vmatprep.subr.bf16.mxu0 %v1143
      %1484 = vmatpush1.bf16.msra.mxu0 %v1142
      %1485 = vmatprep.subr.bf16.mxu0 %v1147
      %1486 = vmatpush1.bf16.msra.mxu0 %v1146
      %1487 = vmatprep.subr.bf16.mxu0 %v1151
      %1488 = vmatpush1.bf16.msra.mxu0 %v1150
      %1489 = vmatprep.subr.bf16.mxu0 %v1155
      %1490 = vmatpush1.bf16.msra.mxu0 %v1154
      %1491 = vmatprep.subr.bf16.mxu0 %v1159
      %1492 = vmatpush1.bf16.msra.mxu0 %v1158
      %1493 = vmatprep.subr.bf16.mxu0 %v1163
      %1494 = vmatpush1.bf16.msra.mxu0 %v1162
      %1495 = vmatprep.mubr.bf16.mxu0 %v453
      %1496 = vmatmul.mubr.bf16.gmra.mrb[0].mxu0 %v452
      %v1497 = vpop.f32.mrb[0].mxu0
      %v1498 = vadd.f32 %v1457, %v1497
      %v1499 = vpop.f32.mrb[0].mxu0
      %v1500 = vadd.f32 %v1459, %v1499
      %v1501 = vpop.f32.mrb[0].mxu0
      %v1502 = vpop.f32.mrb[0].mxu0
      %1503 = vdwg.mxu0
      %1504 = vmatprep.subr.bf16.mxu0 %v1167
      %1505 = vmatpush1.bf16.msra.mxu0 %v1166
      %1506 = vmatprep.subr.bf16.mxu0 %v1171
      %1507 = vmatpush1.bf16.msra.mxu0 %v1170
      %1508 = vmatprep.subr.bf16.mxu0 %v1175
      %1509 = vmatpush1.bf16.msra.mxu0 %v1174
      %1510 = vmatprep.subr.bf16.mxu0 %v1179
      %1511 = vmatpush1.bf16.msra.mxu0 %v1178
      %1512 = vmatprep.subr.bf16.mxu0 %v1183
      %1513 = vmatpush1.bf16.msra.mxu0 %v1182
      %1514 = vmatprep.subr.bf16.mxu0 %v1187
      %1515 = vmatpush1.bf16.msra.mxu0 %v1186
      %1516 = vmatprep.subr.bf16.mxu0 %v1191
      %1517 = vmatpush1.bf16.msra.mxu0 %v1190
      %1518 = vmatprep.subr.bf16.mxu0 %v1195
      %1519 = vmatpush1.bf16.msra.mxu0 %v1194
      %1520 = vmatprep.subr.bf16.mxu0 %v1199
      %1521 = vmatpush1.bf16.msra.mxu0 %v1198
      %1522 = vmatprep.subr.bf16.mxu0 %v1203
      %1523 = vmatpush1.bf16.msra.mxu0 %v1202
      %1524 = vmatprep.subr.bf16.mxu0 %v1207
      %1525 = vmatpush1.bf16.msra.mxu0 %v1206
      %1526 = vmatprep.subr.bf16.mxu0 %v1211
      %1527 = vmatpush1.bf16.msra.mxu0 %v1210
      %1528 = vmatprep.subr.bf16.mxu0 %v1215
      %1529 = vmatpush1.bf16.msra.mxu0 %v1214
      %1530 = vmatprep.subr.bf16.mxu0 %v1219
      %1531 = vmatpush1.bf16.msra.mxu0 %v1218
      %1532 = vmatprep.subr.bf16.mxu0 %v1223
      %1533 = vmatpush1.bf16.msra.mxu0 %v1222
      %1534 = vmatprep.subr.bf16.mxu0 %v1227
      %1535 = vmatpush1.bf16.msra.mxu0 %v1226
      %1536 = vmatprep.mubr.bf16.mxu0 %v455
      %1537 = vmatmul.mubr.bf16.gmra.mrb[0].mxu0 %v454
      %v1538 = vpop.f32.mrb[0].mxu0
      %v1539 = vadd.f32 %v1498, %v1538
      %v1540 = vpop.f32.mrb[0].mxu0
      %v1541 = vadd.f32 %v1500, %v1540
      %v1542 = vpop.f32.mrb[0].mxu0
      %v1543 = vpop.f32.mrb[0].mxu0
      %1544 = vdwg.mxu0
      %1545 = vmatprep.subr.bf16.mxu0 %v1041
      %1546 = vmatpush1.bf16.msra.mxu0 %v1040
      %1547 = vmatprep.subr.bf16.mxu0 %v1045
      %1548 = vmatpush1.bf16.msra.mxu0 %v1044
      %1549 = vmatprep.subr.bf16.mxu0 %v1049
      %1550 = vmatpush1.bf16.msra.mxu0 %v1048
      %1551 = vmatprep.subr.bf16.mxu0 %v1053
      %1552 = vmatpush1.bf16.msra.mxu0 %v1052
      %1553 = vmatprep.subr.bf16.mxu0 %v1057
      %1554 = vmatpush1.bf16.msra.mxu0 %v1056
      %1555 = vmatprep.subr.bf16.mxu0 %v1061
      %1556 = vmatpush1.bf16.msra.mxu0 %v1060
      %1557 = vmatprep.subr.bf16.mxu0 %v1065
      %1558 = vmatpush1.bf16.msra.mxu0 %v1064
      %1559 = vmatprep.subr.bf16.mxu0 %v1069
      %1560 = vmatpush1.bf16.msra.mxu0 %v1068
      %1561 = vmatprep.subr.bf16.mxu0 %v1073
      %1562 = vmatpush1.bf16.msra.mxu0 %v1072
      %1563 = vmatprep.subr.bf16.mxu0 %v1077
      %1564 = vmatpush1.bf16.msra.mxu0 %v1076
      %1565 = vmatprep.subr.bf16.mxu0 %v1081
      %1566 = vmatpush1.bf16.msra.mxu0 %v1080
      %1567 = vmatprep.subr.bf16.mxu0 %v1085
      %1568 = vmatpush1.bf16.msra.mxu0 %v1084
      %1569 = vmatprep.subr.bf16.mxu0 %v1089
      %1570 = vmatpush1.bf16.msra.mxu0 %v1088
      %1571 = vmatprep.subr.bf16.mxu0 %v1093
      %1572 = vmatpush1.bf16.msra.mxu0 %v1092
      %1573 = vmatprep.subr.bf16.mxu0 %v1097
      %1574 = vmatpush1.bf16.msra.mxu0 %v1096
      %1575 = vmatprep.subr.bf16.mxu0 %v1101
      %1576 = vmatpush1.bf16.msra.mxu0 %v1100
      %1577 = vmatprep.mubr.bf16.mxu0 %v451
      %1578 = vmatmul.mubr.bf16.gmra.mrb[0].mxu0 %v450
      %v1579 = vpop.f32.mrb[0].mxu0
      %v1580 = vadd.f32 %v432, %v1579
      %v1581 = vpop.f32.mrb[0].mxu0
      %v1582 = vadd.f32 %v436, %v1581
      %v1583 = vpop.f32.mrb[0].mxu0
      %v1584 = vpop.f32.mrb[0].mxu0
      %1585 = vdwg.mxu0
      %1586 = vmatprep.subr.bf16.mxu0 %v1105
      %1587 = vmatpush1.bf16.msra.mxu0 %v1104
      %1588 = vmatprep.subr.bf16.mxu0 %v1109
      %1589 = vmatpush1.bf16.msra.mxu0 %v1108
      %1590 = vmatprep.subr.bf16.mxu0 %v1113
      %1591 = vmatpush1.bf16.msra.mxu0 %v1112
      %1592 = vmatprep.subr.bf16.mxu0 %v1117
      %1593 = vmatpush1.bf16.msra.mxu0 %v1116
      %1594 = vmatprep.subr.bf16.mxu0 %v1121
      %1595 = vmatpush1.bf16.msra.mxu0 %v1120
      %1596 = vmatprep.subr.bf16.mxu0 %v1125
      %1597 = vmatpush1.bf16.msra.mxu0 %v1124
      %1598 = vmatprep.subr.bf16.mxu0 %v1129
      %1599 = vmatpush1.bf16.msra.mxu0 %v1128
      %1600 = vmatprep.subr.bf16.mxu0 %v1133
      %1601 = vmatpush1.bf16.msra.mxu0 %v1132
      %1602 = vmatprep.subr.bf16.mxu0 %v1137
      %1603 = vmatpush1.bf16.msra.mxu0 %v1136
      %1604 = vmatprep.subr.bf16.mxu0 %v1141
      %1605 = vmatpush1.bf16.msra.mxu0 %v1140
      %1606 = vmatprep.subr.bf16.mxu0 %v1145
      %1607 = vmatpush1.bf16.msra.mxu0 %v1144
      %1608 = vmatprep.subr.bf16.mxu0 %v1149
      %1609 = vmatpush1.bf16.msra.mxu0 %v1148
      %1610 = vmatprep.subr.bf16.mxu0 %v1153
      %1611 = vmatpush1.bf16.msra.mxu0 %v1152
      %1612 = vmatprep.subr.bf16.mxu0 %v1157
      %1613 = vmatpush1.bf16.msra.mxu0 %v1156
      %1614 = vmatprep.subr.bf16.mxu0 %v1161
      %1615 = vmatpush1.bf16.msra.mxu0 %v1160
      %1616 = vmatprep.subr.bf16.mxu0 %v1165
      %1617 = vmatpush1.bf16.msra.mxu0 %v1164
      %1618 = vmatprep.mubr.bf16.mxu0 %v453
      %1619 = vmatmul.mubr.bf16.gmra.mrb[0].mxu0 %v452
      %v1620 = vpop.f32.mrb[0].mxu0
      %v1621 = vadd.f32 %v1580, %v1620
      %v1622 = vpop.f32.mrb[0].mxu0
      %v1623 = vadd.f32 %v1582, %v1622
      %v1624 = vpop.f32.mrb[0].mxu0
      %v1625 = vpop.f32.mrb[0].mxu0
      %1626 = vdwg.mxu0
      %1627 = vmatprep.subr.bf16.mxu0 %v1169
      %1628 = vmatpush1.bf16.msra.mxu0 %v1168
      %1629 = vmatprep.subr.bf16.mxu0 %v1173
      %1630 = vmatpush1.bf16.msra.mxu0 %v1172
      %1631 = vmatprep.subr.bf16.mxu0 %v1177
      %1632 = vmatpush1.bf16.msra.mxu0 %v1176
      %1633 = vmatprep.subr.bf16.mxu0 %v1181
      %1634 = vmatpush1.bf16.msra.mxu0 %v1180
      %1635 = vmatprep.subr.bf16.mxu0 %v1185
      %1636 = vmatpush1.bf16.msra.mxu0 %v1184
      %1637 = vmatprep.subr.bf16.mxu0 %v1189
      %1638 = vmatpush1.bf16.msra.mxu0 %v1188
      %1639 = vmatprep.subr.bf16.mxu0 %v1193
      %1640 = vmatpush1.bf16.msra.mxu0 %v1192
      %1641 = vmatprep.subr.bf16.mxu0 %v1197
      %1642 = vmatpush1.bf16.msra.mxu0 %v1196
      %1643 = vmatprep.subr.bf16.mxu0 %v1201
      %1644 = vmatpush1.bf16.msra.mxu0 %v1200
      %1645 = vmatprep.subr.bf16.mxu0 %v1205
      %1646 = vmatpush1.bf16.msra.mxu0 %v1204
      %1647 = vmatprep.subr.bf16.mxu0 %v1209
      %1648 = vmatpush1.bf16.msra.mxu0 %v1208
      %1649 = vmatprep.subr.bf16.mxu0 %v1213
      %1650 = vmatpush1.bf16.msra.mxu0 %v1212
      %1651 = vmatprep.subr.bf16.mxu0 %v1217
      %1652 = vmatpush1.bf16.msra.mxu0 %v1216
      %1653 = vmatprep.subr.bf16.mxu0 %v1221
      %1654 = vmatpush1.bf16.msra.mxu0 %v1220
      %1655 = vmatprep.subr.bf16.mxu0 %v1225
      %1656 = vmatpush1.bf16.msra.mxu0 %v1224
      %1657 = vmatprep.subr.bf16.mxu0 %v1229
      %1658 = vmatpush1.bf16.msra.mxu0 %v1228
      %1659 = vmatprep.mubr.bf16.mxu0 %v455
      %1660 = vmatmul.mubr.bf16.gmra.mrb[0].mxu0 %v454
      %v1661 = vpop.f32.mrb[0].mxu0
      %v1662 = vadd.f32 %v1621, %v1661
      %v1663 = vpop.f32.mrb[0].mxu0
      %v1664 = vadd.f32 %v1623, %v1663
      %v1665 = vpop.f32.mrb[0].mxu0
      %v1666 = vpop.f32.mrb[0].mxu0
      %1667 = vdwg.mxu0
      %v1668 = vtanh.pop %v1539
      %v1669 = vtanh.pop %v1541
      %v1670 = vtanh.pop %v1662
      %v1671 = vtanh.pop %v1664
      %v1672 = vpack.c.bf16 %v1668, %v1668
      %v1673 = vpack.c.bf16 %v1669, %v1669
      %v1674 = vpack.c.bf16 %v1670, %v1670
      %v1675 = vpack.c.bf16 %v1671, %v1671
      %v1676 = vld [vmem:[%s3] sm:$0xf]
      %v1677 = vld [vmem:[%s3 + $0x4] sm:$0xf]
      %v1678 = vld [vmem:[%s3 + $0x8] sm:$0xf]
      %v1679 = vld [vmem:[%s3 + $0xc] sm:$0xf]
      %v1680 = vld [vmem:[%s3 + $0x10] sm:$0xf]
      %v1681 = vld [vmem:[%s3 + $0x14] sm:$0xf]
      %v1682 = vld [vmem:[%s3 + $0x18] sm:$0xf]
      %v1683 = vld [vmem:[%s3 + $0x1c] sm:$0xf]
      %v1684 = vld [vmem:[%s3 + $0x20] sm:$0xf]
      %v1685 = vld [vmem:[%s3 + $0x24] sm:$0xf]
      %v1686 = vld [vmem:[%s3 + $0x28] sm:$0xf]
      %v1687 = vld [vmem:[%s3 + $0x2c] sm:$0xf]
      %v1688 = vld [vmem:[%s3 + $0x30] sm:$0xf]
      %v1689 = vld [vmem:[%s3 + $0x34] sm:$0xf]
      %v1690 = vld [vmem:[%s3 + $0x38] sm:$0xf]
      %v1691 = vld [vmem:[%s3 + $0x3c] sm:$0xf]
      %v1692 = vld [vmem:[%s3 + $0x40] sm:$0xf]
      %v1693 = vld [vmem:[%s3 + $0x44] sm:$0xf]
      %v1694 = vld [vmem:[%s3 + $0x48] sm:$0xf]
      %v1695 = vld [vmem:[%s3 + $0x4c] sm:$0xf]
      %v1696 = vld [vmem:[%s3 + $0x50] sm:$0xf]
      %v1697 = vld [vmem:[%s3 + $0x54] sm:$0xf]
      %v1698 = vld [vmem:[%s3 + $0x58] sm:$0xf]
      %v1699 = vld [vmem:[%s3 + $0x5c] sm:$0xf]
      %v1700 = vld [vmem:[%s3 + $0x60] sm:$0xf]
      %v1701 = vld [vmem:[%s3 + $0x64] sm:$0xf]
      %v1702 = vld [vmem:[%s3 + $0x68] sm:$0xf]
      %v1703 = vld [vmem:[%s3 + $0x6c] sm:$0xf]
      %v1704 = vld [vmem:[%s3 + $0x70] sm:$0xf]
      %v1705 = vld [vmem:[%s3 + $0x74] sm:$0xf]
      %v1706 = vld [vmem:[%s3 + $0x78] sm:$0xf]
      %v1707 = vld [vmem:[%s3 + $0x7c] sm:$0xf]
      %v1708 = vld [vmem:[%s3 + $0x80] sm:$0xf]
      %v1709 = vld [vmem:[%s3 + $0x84] sm:$0xf]
      %v1710 = vld [vmem:[%s3 + $0x88] sm:$0xf]
      %v1711 = vld [vmem:[%s3 + $0x8c] sm:$0xf]
      %v1712 = vld [vmem:[%s3 + $0x90] sm:$0xf]
      %v1713 = vld [vmem:[%s3 + $0x94] sm:$0xf]
      %v1714 = vld [vmem:[%s3 + $0x98] sm:$0xf]
      %v1715 = vld [vmem:[%s3 + $0x9c] sm:$0xf]
      %v1716 = vld [vmem:[%s3 + $0xa0] sm:$0xf]
      %v1717 = vld [vmem:[%s3 + $0xa4] sm:$0xf]
      %v1718 = vld [vmem:[%s3 + $0xa8] sm:$0xf]
      %v1719 = vld [vmem:[%s3 + $0xac] sm:$0xf]
      %v1720 = vld [vmem:[%s3 + $0xb0] sm:$0xf]
      %v1721 = vld [vmem:[%s3 + $0xb4] sm:$0xf]
      %v1722 = vld [vmem:[%s3 + $0xb8] sm:$0xf]
      %v1723 = vld [vmem:[%s3 + $0xbc] sm:$0xf]
      %v1724 = vld [vmem:[%s3 + $0xc0] sm:$0xf]
      %v1725 = vld [vmem:[%s3 + $0xc4] sm:$0xf]
      %v1726 = vld [vmem:[%s3 + $0xc8] sm:$0xf]
      %v1727 = vld [vmem:[%s3 + $0xcc] sm:$0xf]
      %v1728 = vld [vmem:[%s3 + $0xd0] sm:$0xf]
      %v1729 = vld [vmem:[%s3 + $0xd4] sm:$0xf]
      %v1730 = vld [vmem:[%s3 + $0xd8] sm:$0xf]
      %v1731 = vld [vmem:[%s3 + $0xdc] sm:$0xf]
      %v1732 = vld [vmem:[%s3 + $0xe0] sm:$0xf]
      %v1733 = vld [vmem:[%s3 + $0xe4] sm:$0xf]
      %v1734 = vld [vmem:[%s3 + $0xe8] sm:$0xf]
      %v1735 = vld [vmem:[%s3 + $0xec] sm:$0xf]
      %v1736 = vld [vmem:[%s3 + $0xf0] sm:$0xf]
      %v1737 = vld [vmem:[%s3 + $0xf4] sm:$0xf]
      %v1738 = vld [vmem:[%s3 + $0xf8] sm:$0xf]
      %v1739 = vld [vmem:[%s3 + $0xfc] sm:$0xf]
      %v1740 = vld [vmem:[%s4] sm:$0x1]
      %v1742 = vlaneseq
      %v1743 = vshrl.u32 %v1742, 7
      %v1744 = vsub.s32 0, %v1743
      %v1745 = vrot.slane %v1740, %v1744
      %v1811 = vunpack.c.l.b16 %v1676
      %v1812 = vunpack.c.l.b16 %v1677
      %v1813 = vunpack.c.l.b16 %v1678
      %v1814 = vunpack.c.l.b16 %v1679
      %v1815 = vunpack.c.l.b16 %v1680
      %v1816 = vunpack.c.l.b16 %v1681
      %v1817 = vunpack.c.l.b16 %v1682
      %v1818 = vunpack.c.l.b16 %v1683
      %v1819 = vunpack.c.l.b16 %v1684
      %v1820 = vunpack.c.l.b16 %v1685
      %v1821 = vunpack.c.l.b16 %v1686
      %v1822 = vunpack.c.l.b16 %v1687
      %v1823 = vunpack.c.l.b16 %v1688
      %v1824 = vunpack.c.l.b16 %v1689
      %v1825 = vunpack.c.l.b16 %v1690
      %v1826 = vunpack.c.l.b16 %v1691
      %v1827 = vunpack.c.l.b16 %v1692
      %v1828 = vunpack.c.l.b16 %v1693
      %v1829 = vunpack.c.l.b16 %v1694
      %v1830 = vunpack.c.l.b16 %v1695
      %v1831 = vunpack.c.l.b16 %v1696
      %v1832 = vunpack.c.l.b16 %v1697
      %v1833 = vunpack.c.l.b16 %v1698
      %v1834 = vunpack.c.l.b16 %v1699
      %v1835 = vunpack.c.l.b16 %v1700
      %v1836 = vunpack.c.l.b16 %v1701
      %v1837 = vunpack.c.l.b16 %v1702
      %v1838 = vunpack.c.l.b16 %v1703
      %v1839 = vunpack.c.l.b16 %v1704
      %v1840 = vunpack.c.l.b16 %v1705
      %v1841 = vunpack.c.l.b16 %v1706
      %v1842 = vunpack.c.l.b16 %v1707
      %v1843 = vunpack.c.l.b16 %v1708
      %v1844 = vunpack.c.l.b16 %v1709
      %v1845 = vunpack.c.l.b16 %v1710
      %v1846 = vunpack.c.l.b16 %v1711
      %v1847 = vunpack.c.l.b16 %v1712
      %v1848 = vunpack.c.l.b16 %v1713
      %v1849 = vunpack.c.l.b16 %v1714
      %v1850 = vunpack.c.l.b16 %v1715
      %v1851 = vunpack.c.l.b16 %v1716
      %v1852 = vunpack.c.l.b16 %v1717
      %v1853 = vunpack.c.l.b16 %v1718
      %v1854 = vunpack.c.l.b16 %v1719
      %v1855 = vunpack.c.l.b16 %v1720
      %v1856 = vunpack.c.l.b16 %v1721
      %v1857 = vunpack.c.l.b16 %v1722
      %v1858 = vunpack.c.l.b16 %v1723
      %v1859 = vunpack.c.l.b16 %v1724
      %v1860 = vunpack.c.l.b16 %v1725
      %v1861 = vunpack.c.l.b16 %v1726
      %v1862 = vunpack.c.l.b16 %v1727
      %v1863 = vunpack.c.l.b16 %v1728
      %v1864 = vunpack.c.l.b16 %v1729
      %v1865 = vunpack.c.l.b16 %v1730
      %v1866 = vunpack.c.l.b16 %v1731
      %v1867 = vunpack.c.l.b16 %v1732
      %v1868 = vunpack.c.l.b16 %v1733
      %v1869 = vunpack.c.l.b16 %v1734
      %v1870 = vunpack.c.l.b16 %v1735
      %v1871 = vunpack.c.l.b16 %v1736
      %v1872 = vunpack.c.l.b16 %v1737
      %v1873 = vunpack.c.l.b16 %v1738
      %v1874 = vunpack.c.l.b16 %v1739
      %v1875 = vpack.c.b16 %v1812, %v1811
      %v1876 = vpack.c.b16 %v1814, %v1813
      %v1877 = vpack.c.b16 %v1816, %v1815
      %v1878 = vpack.c.b16 %v1818, %v1817
      %v1879 = vpack.c.b16 %v1820, %v1819
      %v1880 = vpack.c.b16 %v1822, %v1821
      %v1881 = vpack.c.b16 %v1824, %v1823
      %v1882 = vpack.c.b16 %v1826, %v1825
      %v1883 = vpack.c.b16 %v1828, %v1827
      %v1884 = vpack.c.b16 %v1830, %v1829
      %v1885 = vpack.c.b16 %v1832, %v1831
      %v1886 = vpack.c.b16 %v1834, %v1833
      %v1887 = vpack.c.b16 %v1836, %v1835
      %v1888 = vpack.c.b16 %v1838, %v1837
      %v1889 = vpack.c.b16 %v1840, %v1839
      %v1890 = vpack.c.b16 %v1842, %v1841
      %v1891 = vpack.c.b16 %v1844, %v1843
      %v1892 = vpack.c.b16 %v1846, %v1845
      %v1893 = vpack.c.b16 %v1848, %v1847
      %v1894 = vpack.c.b16 %v1850, %v1849
      %v1895 = vpack.c.b16 %v1852, %v1851
      %v1896 = vpack.c.b16 %v1854, %v1853
      %v1897 = vpack.c.b16 %v1856, %v1855
      %v1898 = vpack.c.b16 %v1858, %v1857
      %v1899 = vpack.c.b16 %v1860, %v1859
      %v1900 = vpack.c.b16 %v1862, %v1861
      %v1901 = vpack.c.b16 %v1864, %v1863
      %v1902 = vpack.c.b16 %v1866, %v1865
      %v1903 = vpack.c.b16 %v1868, %v1867
      %v1904 = vpack.c.b16 %v1870, %v1869
      %v1905 = vpack.c.b16 %v1872, %v1871
      %v1906 = vpack.c.b16 %v1874, %v1873
      %1939 = vmatprep.subr.bf16.mxu0 0
      %1940 = vmatpush1.bf16.msra.mxu0 %v1875
      %1941 = vmatprep.subr.bf16.mxu0 0
      %1942 = vmatpush1.bf16.msra.mxu0 %v1876
      %1943 = vmatprep.subr.bf16.mxu0 0
      %1944 = vmatpush1.bf16.msra.mxu0 %v1877
      %1945 = vmatprep.subr.bf16.mxu0 0
      %1946 = vmatpush1.bf16.msra.mxu0 %v1878
      %1947 = vmatprep.subr.bf16.mxu0 0
      %1948 = vmatpush1.bf16.msra.mxu0 %v1879
      %1949 = vmatprep.subr.bf16.mxu0 0
      %1950 = vmatpush1.bf16.msra.mxu0 %v1880
      %1951 = vmatprep.subr.bf16.mxu0 0
      %1952 = vmatpush1.bf16.msra.mxu0 %v1881
      %1953 = vmatprep.subr.bf16.mxu0 0
      %1954 = vmatpush1.bf16.msra.mxu0 %v1882
      %1955 = vmatprep.subr.bf16.mxu0 0
      %1956 = vmatpush1.bf16.msra.mxu0 %v1883
      %1957 = vmatprep.subr.bf16.mxu0 0
      %1958 = vmatpush1.bf16.msra.mxu0 %v1884
      %1959 = vmatprep.subr.bf16.mxu0 0
      %1960 = vmatpush1.bf16.msra.mxu0 %v1885
      %1961 = vmatprep.subr.bf16.mxu0 0
      %1962 = vmatpush1.bf16.msra.mxu0 %v1886
      %1963 = vmatprep.subr.bf16.mxu0 0
      %1964 = vmatpush1.bf16.msra.mxu0 %v1887
      %1965 = vmatprep.subr.bf16.mxu0 0
      %1966 = vmatpush1.bf16.msra.mxu0 %v1888
      %1967 = vmatprep.subr.bf16.mxu0 0
      %1968 = vmatpush1.bf16.msra.mxu0 %v1889
      %1969 = vmatprep.subr.bf16.mxu0 0
      %1970 = vmatpush1.bf16.msra.mxu0 %v1890
      %1971 = vmatprep.mubr.bf16.mxu0 %v1673
      %1972 = vmatmul.mubr.bf16.gmra.mrb[0].mxu0 %v1672
      %v1973 = vpop.f32.mrb[0].mxu0
      %v1974 = vadd.f32 %v1745, %v1973
      %v1975 = vpop.f32.mrb[0].mxu0
      %v1976 = vpop.f32.mrb[0].mxu0
      %v1977 = vpop.f32.mrb[0].mxu0
      %1978 = vdwg.mxu0
      %1979 = vmatprep.subr.bf16.mxu0 0
      %1980 = vmatpush1.bf16.msra.mxu0 %v1891
      %1981 = vmatprep.subr.bf16.mxu0 0
      %1982 = vmatpush1.bf16.msra.mxu0 %v1892
      %1983 = vmatprep.subr.bf16.mxu0 0
      %1984 = vmatpush1.bf16.msra.mxu0 %v1893
      %1985 = vmatprep.subr.bf16.mxu0 0
      %1986 = vmatpush1.bf16.msra.mxu0 %v1894
      %1987 = vmatprep.subr.bf16.mxu0 0
      %1988 = vmatpush1.bf16.msra.mxu0 %v1895
      %1989 = vmatprep.subr.bf16.mxu0 0
      %1990 = vmatpush1.bf16.msra.mxu0 %v1896
      %1991 = vmatprep.subr.bf16.mxu0 0
      %1992 = vmatpush1.bf16.msra.mxu0 %v1897
      %1993 = vmatprep.subr.bf16.mxu0 0
      %1994 = vmatpush1.bf16.msra.mxu0 %v1898
      %1995 = vmatprep.subr.bf16.mxu0 0
      %1996 = vmatpush1.bf16.msra.mxu0 %v1899
      %1997 = vmatprep.subr.bf16.mxu0 0
      %1998 = vmatpush1.bf16.msra.mxu0 %v1900
      %1999 = vmatprep.subr.bf16.mxu0 0
      %2000 = vmatpush1.bf16.msra.mxu0 %v1901
      %2001 = vmatprep.subr.bf16.mxu0 0
      %2002 = vmatpush1.bf16.msra.mxu0 %v1902
      %2003 = vmatprep.subr.bf16.mxu0 0
      %2004 = vmatpush1.bf16.msra.mxu0 %v1903
      %2005 = vmatprep.subr.bf16.mxu0 0
      %2006 = vmatpush1.bf16.msra.mxu0 %v1904
      %2007 = vmatprep.subr.bf16.mxu0 0
      %2008 = vmatpush1.bf16.msra.mxu0 %v1905
      %2009 = vmatprep.subr.bf16.mxu0 0
      %2010 = vmatpush1.bf16.msra.mxu0 %v1906
      %2011 = vmatprep.mubr.bf16.mxu0 %v1675
      %2012 = vmatmul.mubr.bf16.gmra.mrb[0].mxu0 %v1674
      %v2013 = vpop.f32.mrb[0].mxu0
      %v2014 = vadd.f32 %v1974, %v2013
      %v2015 = vpop.f32.mrb[0].mxu0
      %v2016 = vpop.f32.mrb[0].mxu0
      %v2017 = vpop.f32.mrb[0].mxu0
      %2018 = vdwg.mxu0
      %2019 = vst [vmem:[%s222] sm:$0xff] %v2014
      %p2020 = scmp.lt.s32.totalorder %s16, 1
      %s2021 = scalar_select %p2020, %s16, 1
      %s2022 = smul.addr %s2021, 8
      %s2023 = scalar_lea.vmem %s5, %s2022
      // Predicated region
      $region41: #{_mlp_forward.1} parent=39 // pred_check
        %p2024 = pneg %p144
      $region42: #{_mlp_forward.1} parent=39 // pred_check_branch
        %2026 = sbr.rel (%p2024) target = $region44
      $region43: #{_mlp_forward.1} parent=39 // pred_region
        _
      $region44: #{_mlp_forward.1} parent=39 // pred_fallthru
        _
    $region40: #{_mlp_forward.1} parent=5 // pred_fallthru
      _
    %p2027 = scmp.le.s32.totalorder 2, %s11
    // Predicated region
    $region45: #{_mlp_forward.1} parent=5 // pred_check
      %p2028 = pneg %p2027
    $region46: #{_mlp_forward.1} parent=5 // pred_check_branch
      %2030 = sbr.rel (%p2028) target = $region48
    $region47: #{_mlp_forward.1} parent=5 // pred_region
      %s2031 = ssub.s32 %s11, 2
      // Predicated region
      $region49: #{_mlp_forward.1} parent=47 // pred_check
        %p2032 = pneg %p150
      $region50: #{_mlp_forward.1} parent=47 // pred_check_branch
        %2034 = sbr.rel (%p2032) target = $region52
      $region51: #{_mlp_forward.1} parent=47 // pred_region
        %p2035 = scmp.lt.s32.totalorder %s17, 1
        %s2036 = scalar_select %p2035, %s17, 1
        %s2037 = smul.addr %s2036, 8
        %s2038 = scalar_lea.vmem %s5, %s2037
      $region52: #{_mlp_forward.1} parent=47 // pred_fallthru
        _
    $region48: #{_mlp_forward.1} parent=5 // pred_fallthru
      _
  $region6: #{_mlp_forward.1} parent=0 // loop_footer
    %s15 = sadd.s32 1, %s11
  $region7: #{_mlp_forward.1} parent=0 // loop_footer_branch
    %10 = sbr.rel target = $region3
  $region8: #{_mlp_forward.1} parent=0 // loop_exit
    _

</llo_original>
